<compile_context>
chip_gen: v7x
topology: tpu7x:2x2x1
jax: 0.10.0
libtpu: 0.0.40
codegen_flags: <defaults>
</compile_context>

<pallas_src>
import functools

import jax
import jax.numpy as jnp
import numpy as np
from jax import lax
from jax.experimental import pallas as pl
from jax.experimental.pallas import tpu as pltpu


# ----------------------------- Pallas kernel ------------------------------ #
def _shallow_rnn_kernel(x_ref, wih_ref, whh_ref, wsp_ref, vecs_ref, wfcw_ref,
                        bfc_ref, out_ref, h_all, *, batch, group, pool):
    """Whole-batch forward pass in one invocation.

    x_ref   : (T*B, C+1)  rows ordered (t, b) [row = t*B + b], ones column last
    wih_ref : (C+1, H)    W_ih^T with (b_ih + b_hh) appended as the last row
    whh_ref : (H, H)      W_hh^T
    wsp_ref : (H, K)      spatial-conv weight (matmul over H)
    vecs_ref: (3, K)      rows = [conv bias, BN scale, BN shift]
    wfcw_ref: (Tp, K, O)  per-window FC weight, 1/pool_size folded in
    bfc_ref : (1, O)
    out_ref : (B, O)
    h_all   : (T*B, H)    scratch -- projection, then every hidden state
    """
    B = batch
    G = group
    TB, H = h_all.shape
    T = TB // B
    GB = G * B                      # rows written per recurrence group
    Tp, K, O = wfcw_ref.shape
    PB = pool * B                   # rows per pooling window

    whh = whh_ref[...]                                               # (H, H)

    # --- hoisted input projection (bias folded into the augmented matmul),
    #     written straight into the hidden-state scratch (no xw buffer) -------
    h_all[...] = jnp.dot(x_ref[...], wih_ref[...],
                         preferred_element_type=jnp.float32)         # (T*B, H)

    # --- batched Elman recurrence: h_t = tanh(xW_t + h_{t-1} W_hh^T) ---------
    #     processed G steps at a time so every h_all access is a full
    #     (GB, H) sublane tile (no masked per-step stores / RMW).
    def group_step(g, h_prev):
        r0 = pl.multiple_of(g * GB, GB)
        xw_tile = h_all[pl.ds(r0, GB), :]         # (GB, H) projections of group
        h = h_prev
        hs = []
        for i in range(G):                        # tiny static loop, in vregs
            h = jnp.tanh(xw_tile[i * B:(i + 1) * B, :]
                         + jnp.dot(h, whh, preferred_element_type=jnp.float32))
            hs.append(h)
        h_all[pl.ds(r0, GB), :] = hs[0] if G == 1 else jnp.concatenate(hs, axis=0)
        return h

    n_groups = T // G
    lax.fori_loop(0, n_groups, group_step, jnp.zeros((B, H), jnp.float32),
                  unroll=min(n_groups, 8))

    # --- conv(H-matmul) + ELU + folded BN + avg-pool + FC, fused per window --
    wsp = wsp_ref[...]                                               # (H, K)
    b_sp = vecs_ref[0:1, :]                                          # (1, K)
    bn_sc = vecs_ref[1:2, :]
    bn_sh = vecs_ref[2:3, :]

    def pool_fc_step(w, zacc):
        r0 = pl.multiple_of(w * PB, PB)
        blk = h_all[pl.ds(r0, PB), :]                                # (PB, H)
        s = jnp.dot(blk, wsp, preferred_element_type=jnp.float32) + b_sp
        s = jnp.where(s > 0, s, jnp.exp(jnp.minimum(s, 0.0)) - 1.0)  # ELU
        s = s * bn_sc + bn_sh                                        # BN (eval)
        return zacc + jnp.dot(s, wfcw_ref[w],
                              preferred_element_type=jnp.float32)    # (PB, O)

    zacc = lax.fori_loop(0, Tp, pool_fc_step, jnp.zeros((PB, O), jnp.float32),
                         unroll=min(Tp, 8))

    # --- batch reduction of the interleaved rows (row = p*B + b) -------------
    #     tiny selector built in-kernel from iota; Dropout is identity in eval.
    sel = (lax.broadcasted_iota(jnp.int32, (B, PB), 1) % B
           == lax.broadcasted_iota(jnp.int32, (B, PB), 0)).astype(jnp.float32)
    out_ref[...] = (jnp.dot(sel, zacc, preferred_element_type=jnp.float32)
                    + bfc_ref[...])                                  # (B, O)


# ------------------------------- wrapper ----------------------------------- #
def shallow_rnn_net(x, kparams, *, pool_size):
    """x: (B, C, T) float32, same layout as the PyTorch module input."""
    wih_aug, whh_t, wsp, vecs, wfc_w, bfc = kparams
    B, C, T = x.shape
    H = whh_t.shape[0]
    O = bfc.shape[1]

    # time-major, batch-interleaved rows: row t*B + b holds x[b, :, t];
    # trailing ones column folds the RNN bias into the hoisted projection.
    x2 = jnp.transpose(x, (2, 0, 1)).reshape(T * B, C).astype(jnp.float32)
    x2 = jnp.concatenate([x2, jnp.ones((T * B, 1), jnp.float32)], axis=1)

    # recurrence group size: full (8, H) sublane tiles for h_all stores.
    if B % 8 == 0:
        G = 1
    elif 8 % B == 0 and T % (8 // B) == 0:
        G = 8 // B
    else:
        G = 1   # fallback: masked per-step stores (correct, just slower)

    kernel = functools.partial(_shallow_rnn_kernel, batch=B, group=G,
                               pool=pool_size)

    args = (x2, wih_aug, whh_t, wsp, vecs, wfc_w, bfc)

    def _full_spec(a):
        nd = a.ndim
        return pl.BlockSpec(a.shape, lambda: (0,) * nd)

    # scoped VMEM: raise above the 16/32 MiB defaults when shapes grow;
    # clamped to stay below v7x's 64 MiB physical VMEM.
    scratch_bytes = T * B * H * 4
    in_bytes = sum(int(a.size) * a.dtype.itemsize for a in args)
    vmem_limit = int(min(56 * 1024 * 1024,
                         max(32 * 1024 * 1024, 2 * (in_bytes + scratch_bytes))))

    out = pl.pallas_call(
        kernel,
        out_shape=jax.ShapeDtypeStruct((B, O), jnp.float32),
        in_specs=[_full_spec(a) for a in args],
        out_specs=pl.BlockSpec((B, O), lambda: (0, 0)),
        scratch_shapes=[pltpu.VMEM((T * B, H), jnp.float32)],  # all hidden states
        compiler_params=pltpu.CompilerParams(vmem_limit_bytes=vmem_limit),
    )(*args)
    # NOTE: for large B, tile the batch over a leading grid axis marked
    # "parallel" (dimension_semantics) so v7x's 2 TensorCores are both used;
    # at B=2 a grid would be pure per-step overhead, so none is used.
    return out


# ------------------------- deterministic parameters ------------------------ #
def init_torch_style_params(key, n_chans, n_outputs, n_times, num_kernels,
                            pool_size, hidden_size):
    """Parameters in PyTorch layouts, deterministic (synthetic)."""
    K = num_kernels * 2
    Tp = n_times // pool_size
    f32 = jnp.float32
    ks = jax.random.split(key, 12)
    p = dict(
        w_ih=0.3 * jax.random.normal(ks[0], (hidden_size, n_chans), f32),
        w_hh=0.2 * jax.random.normal(ks[1], (hidden_size, hidden_size), f32),
        b_ih=0.1 * jax.random.normal(ks[2], (hidden_size,), f32),
        b_hh=0.1 * jax.random.normal(ks[3], (hidden_size,), f32),
        w_sp=0.2 * jax.random.normal(ks[4], (K, 1, hidden_size, 1), f32),
        b_sp=0.1 * jax.random.normal(ks[5], (K,), f32),
        gamma=1.0 + 0.1 * jax.random.normal(ks[6], (K,), f32),
        beta=0.1 * jax.random.normal(ks[7], (K,), f32),
        run_mean=0.05 * jax.random.normal(ks[8], (K,), f32),
        run_var=jnp.abs(1.0 + 0.1 * jax.random.normal(ks[9], (K,), f32)),
        w_fc=0.2 * jax.random.normal(ks[10], (n_outputs, K * Tp), f32),
        b_fc=0.1 * jax.random.normal(ks[11], (n_outputs,), f32),
    )
    return p


def pack_for_kernel(p, n_times, pool_size, eps=1e-5):
    """Repack PyTorch-layout params into the consolidated kernel layout."""
    H = p["w_hh"].shape[0]
    K = p["w_sp"].shape[0]
    O = p["w_fc"].shape[0]
    Tp = n_times // pool_size
    # RNN: W_ih^T with the combined bias folded in as an extra row.
    wih_aug = jnp.concatenate(
        [p["w_ih"].T, (p["b_ih"] + p["b_hh"]).reshape(1, H)], axis=0)  # (C+1, H)
    whh_t = p["w_hh"].T                                                # (H, H)
    # Conv2d(1, K, (H, 1)) == matmul over H.
    wsp = p["w_sp"][:, 0, :, 0].T                                      # (H, K)
    # Folded eval-mode BatchNorm + conv bias, stacked into one small array.
    inv_std = 1.0 / jnp.sqrt(p["run_var"] + eps)
    bn_scale = p["gamma"] * inv_std
    bn_shift = p["beta"] - p["run_mean"] * bn_scale
    vecs = jnp.stack([p["b_sp"], bn_scale, bn_shift], axis=0)          # (3, K)
    # PyTorch flatten after pooling is channel-major: flat index = k*Tp + w.
    # Per-window FC weight (Tp, K, O) with the 1/pool_size avg folded in.
    wfc_w = (p["w_fc"].reshape(O, K, Tp).transpose(2, 1, 0)
             / float(pool_size))                                       # (Tp, K, O)
    bfc = p["b_fc"].reshape(1, O)
    return (wih_aug, whh_t, wsp, vecs, wfc_w, bfc)


# ------------------------- pure-JAX reference (check) ---------------------- #
def reference_forward(x, p, pool_size, eps=1e-5):
    with jax.default_matmul_precision("highest"):
        B, C, T = x.shape
        H = p["w_hh"].shape[0]
        xs = jnp.transpose(x, (0, 2, 1))                              # (B, T, C)

        def step(h, x_t):
            h = jnp.tanh(x_t @ p["w_ih"].T + p["b_ih"] + h @ p["w_hh"].T + p["b_hh"])
            return h, h

        _, hs = lax.scan(step, jnp.zeros((B, H), jnp.float32),
                         jnp.transpose(xs, (1, 0, 2)))                # (T, B, H)
        hs = jnp.transpose(hs, (1, 0, 2))                             # (B, T, H)
        wk = p["w_sp"][:, 0, :, 0]                                    # (K, H)
        s = jnp.einsum("bth,kh->bkt", hs, wk) + p["b_sp"][None, :, None]
        s = jnp.where(s > 0, s, jnp.exp(jnp.minimum(s, 0.0)) - 1.0)
        s = ((s - p["run_mean"][None, :, None])
             / jnp.sqrt(p["run_var"] + eps)[None, :, None]
             * p["gamma"][None, :, None] + p["beta"][None, :, None])
        K = wk.shape[0]
        Tp = T // pool_size
        pooled = jnp.mean(
            s[:, :, :Tp * pool_size].reshape(B, K, Tp, pool_size), axis=3)
        flat = pooled.reshape(B, K * Tp)
        return flat @ p["w_fc"].T + p["b_fc"]


# ----------------------------------- main ----------------------------------- #
if __name__ == "__main__":
    # Small shapes consistent with the module's constructor arguments.
    B, n_chans, n_times = 2, 4, 16
    n_outputs = 3
    num_kernels = 4          # -> 8 conv output channels
    pool_size = 4            # -> 4 pooled time windows
    hidden_size = 32

    key = jax.random.PRNGKey(0)
    kx, kp = jax.random.split(key)
    x = jax.random.normal(kx, (B, n_chans, n_times), jnp.float32)

    torch_p = init_torch_style_params(kp, n_chans, n_outputs, n_times,
                                      num_kernels, pool_size, hidden_size)
    kparams = pack_for_kernel(torch_p, n_times, pool_size)

    out = shallow_rnn_net(x, kparams, pool_size=pool_size)
    out = jax.block_until_ready(out)

    ref = jax.block_until_ready(reference_forward(x, torch_p, pool_size))
    np.testing.assert_allclose(np.asarray(out), np.asarray(ref),
                               rtol=1e-2, atol=2e-3)

    print("KERNEL_OK")
</pallas_src>

<mosaic_0001>
module attributes {stable_mosaic.version = 11 : i64} {
  func.func @_shallow_rnn_kernel(%arg0: memref<32x5xf32, #tpu.memory_space<vmem>>, %arg1: memref<5x32xf32, #tpu.memory_space<vmem>>, %arg2: memref<32x32xf32, #tpu.memory_space<vmem>>, %arg3: memref<32x8xf32, #tpu.memory_space<vmem>>, %arg4: memref<3x8xf32, #tpu.memory_space<vmem>>, %arg5: memref<4x8x3xf32, #tpu.memory_space<vmem>>, %arg6: memref<1x3xf32, #tpu.memory_space<vmem>>, %arg7: memref<2x3xf32, #tpu.memory_space<vmem>>, %arg8: memref<32x32xf32, #tpu.memory_space<vmem>>) attributes {dimension_semantics = [], scalar_prefetch = 0 : i64, scratch_operands = 1 : i64, tpu.core_type = #tpu.core_type<tc>} {
    %c0 = arith.constant 0 : index
    %c0_0 = arith.constant 0 : index
    %0 = vector.load %arg2[%c0, %c0_0] : memref<32x32xf32, #tpu.memory_space<vmem>>, vector<32x32xf32>
    %c0_1 = arith.constant 0 : index
    %c0_2 = arith.constant 0 : index
    %1 = vector.load %arg0[%c0_1, %c0_2] : memref<32x5xf32, #tpu.memory_space<vmem>>, vector<32x5xf32>
    %c0_3 = arith.constant 0 : index
    %c0_4 = arith.constant 0 : index
    %2 = vector.load %arg1[%c0_3, %c0_4] : memref<5x32xf32, #tpu.memory_space<vmem>>, vector<5x32xf32>
    %cst = arith.constant dense<0.000000e+00> : vector<32x32xf32>
    %3 = tpu.matmul %1, %2, %cst {dimension_numbers = #tpu.dot_dimension_numbers<[1], [0], [0], [1], [0, 0, 1, 1], [], []>} : vector<32x5xf32>, vector<5x32xf32>, vector<32x32xf32> -> vector<32x32xf32>
    %c0_5 = arith.constant 0 : index
    %c0_6 = arith.constant 0 : index
    %4 = vector.load %arg8[%c0_5, %c0_6] : memref<32x32xf32, #tpu.memory_space<vmem>>, vector<32x32xf32>
    tpu.vector_store %arg8[%c0_5, %c0_6], %3 {strides = array<i32>} : memref<32x32xf32, #tpu.memory_space<vmem>>, vector<32x32xf32>,
    %cst_7 = arith.constant 0.000000e+00 : f32
    %5 = vector.broadcast %cst_7 : f32 to vector<2x32xf32>
    %c0_i32 = arith.constant 0 : i32
    %c8_i32 = arith.constant 8 : i32
    %6 = arith.muli %c0_i32, %c8_i32 : i32
    %7 = tpu.assume_multiple %6, 8 : i32
    %8 = arith.index_cast %7 : i32 to index
    %c0_8 = arith.constant 0 : index
    %9 = vector.load %arg8[%8, %c0_8] : memref<32x32xf32, #tpu.memory_space<vmem>>, vector<8x32xf32>
    %10 = vector.extract_strided_slice %9 {offsets = [0, 0], sizes = [2, 32], strides = [1, 1]} : vector<8x32xf32> to vector<2x32xf32>
    %cst_9 = arith.constant dense<0.000000e+00> : vector<2x32xf32>
    %11 = tpu.matmul %5, %0, %cst_9 {dimension_numbers = #tpu.dot_dimension_numbers<[1], [0], [0], [1], [0, 0, 1, 1], [], []>} : vector<2x32xf32>, vector<32x32xf32>, vector<2x32xf32> -> vector<2x32xf32>
    %12 = arith.addf %10, %11 : vector<2x32xf32>
    %13 = math.tanh %12 : vector<2x32xf32>
    %14 = vector.extract_strided_slice %9 {offsets = [2, 0], sizes = [2, 32], strides = [1, 1]} : vector<8x32xf32> to vector<2x32xf32>
    %cst_10 = arith.constant dense<0.000000e+00> : vector<2x32xf32>
    %15 = tpu.matmul %13, %0, %cst_10 {dimension_numbers = #tpu.dot_dimension_numbers<[1], [0], [0], [1], [0, 0, 1, 1], [], []>} : vector<2x32xf32>, vector<32x32xf32>, vector<2x32xf32> -> vector<2x32xf32>
    %16 = arith.addf %14, %15 : vector<2x32xf32>
    %17 = math.tanh %16 : vector<2x32xf32>
    %18 = vector.extract_strided_slice %9 {offsets = [4, 0], sizes = [2, 32], strides = [1, 1]} : vector<8x32xf32> to vector<2x32xf32>
    %cst_11 = arith.constant dense<0.000000e+00> : vector<2x32xf32>
    %19 = tpu.matmul %17, %0, %cst_11 {dimension_numbers = #tpu.dot_dimension_numbers<[1], [0], [0], [1], [0, 0, 1, 1], [], []>} : vector<2x32xf32>, vector<32x32xf32>, vector<2x32xf32> -> vector<2x32xf32>
    %20 = arith.addf %18, %19 : vector<2x32xf32>
    %21 = math.tanh %20 : vector<2x32xf32>
    %22 = vector.extract_strided_slice %9 {offsets = [6, 0], sizes = [2, 32], strides = [1, 1]} : vector<8x32xf32> to vector<2x32xf32>
    %cst_12 = arith.constant dense<0.000000e+00> : vector<2x32xf32>
    %23 = tpu.matmul %21, %0, %cst_12 {dimension_numbers = #tpu.dot_dimension_numbers<[1], [0], [0], [1], [0, 0, 1, 1], [], []>} : vector<2x32xf32>, vector<32x32xf32>, vector<2x32xf32> -> vector<2x32xf32>
    %24 = arith.addf %22, %23 : vector<2x32xf32>
    %25 = math.tanh %24 : vector<2x32xf32>
    %26 = tpu.concatenate %13, %17, %21, %25 in 0 : vector<2x32xf32>, vector<2x32xf32>, vector<2x32xf32>, vector<2x32xf32> -> vector<8x32xf32>
    %27 = arith.index_cast %7 : i32 to index
    %c0_13 = arith.constant 0 : index
    %28 = vector.load %arg8[%27, %c0_13] : memref<32x32xf32, #tpu.memory_space<vmem>>, vector<8x32xf32>
    tpu.vector_store %arg8[%27, %c0_13], %26 {strides = array<i32>} : memref<32x32xf32, #tpu.memory_space<vmem>>, vector<8x32xf32>,
    %c1_i32 = arith.constant 1 : i32
    %c8_i32_14 = arith.constant 8 : i32
    %29 = arith.muli %c1_i32, %c8_i32_14 : i32
    %30 = tpu.assume_multiple %29, 8 : i32
    %31 = arith.index_cast %30 : i32 to index
    %c0_15 = arith.constant 0 : index
    %32 = vector.load %arg8[%31, %c0_15] : memref<32x32xf32, #tpu.memory_space<vmem>>, vector<8x32xf32>
    %33 = vector.extract_strided_slice %32 {offsets = [0, 0], sizes = [2, 32], strides = [1, 1]} : vector<8x32xf32> to vector<2x32xf32>
    %cst_16 = arith.constant dense<0.000000e+00> : vector<2x32xf32>
    %34 = tpu.matmul %25, %0, %cst_16 {dimension_numbers = #tpu.dot_dimension_numbers<[1], [0], [0], [1], [0, 0, 1, 1], [], []>} : vector<2x32xf32>, vector<32x32xf32>, vector<2x32xf32> -> vector<2x32xf32>
    %35 = arith.addf %33, %34 : vector<2x32xf32>
    %36 = math.tanh %35 : vector<2x32xf32>
    %37 = vector.extract_strided_slice %32 {offsets = [2, 0], sizes = [2, 32], strides = [1, 1]} : vector<8x32xf32> to vector<2x32xf32>
    %cst_17 = arith.constant dense<0.000000e+00> : vector<2x32xf32>
    %38 = tpu.matmul %36, %0, %cst_17 {dimension_numbers = #tpu.dot_dimension_numbers<[1], [0], [0], [1], [0, 0, 1, 1], [], []>} : vector<2x32xf32>, vector<32x32xf32>, vector<2x32xf32> -> vector<2x32xf32>
    %39 = arith.addf %37, %38 : vector<2x32xf32>
    %40 = math.tanh %39 : vector<2x32xf32>
    %41 = vector.extract_strided_slice %32 {offsets = [4, 0], sizes = [2, 32], strides = [1, 1]} : vector<8x32xf32> to vector<2x32xf32>
    %cst_18 = arith.constant dense<0.000000e+00> : vector<2x32xf32>
    %42 = tpu.matmul %40, %0, %cst_18 {dimension_numbers = #tpu.dot_dimension_numbers<[1], [0], [0], [1], [0, 0, 1, 1], [], []>} : vector<2x32xf32>, vector<32x32xf32>, vector<2x32xf32> -> vector<2x32xf32>
    %43 = arith.addf %41, %42 : vector<2x32xf32>
    %44 = math.tanh %43 : vector<2x32xf32>
    %45 = vector.extract_strided_slice %32 {offsets = [6, 0], sizes = [2, 32], strides = [1, 1]} : vector<8x32xf32> to vector<2x32xf32>
    %cst_19 = arith.constant dense<0.000000e+00> : vector<2x32xf32>
    %46 = tpu.matmul %44, %0, %cst_19 {dimension_numbers = #tpu.dot_dimension_numbers<[1], [0], [0], [1], [0, 0, 1, 1], [], []>} : vector<2x32xf32>, vector<32x32xf32>, vector<2x32xf32> -> vector<2x32xf32>
    %47 = arith.addf %45, %46 : vector<2x32xf32>
    %48 = math.tanh %47 : vector<2x32xf32>
    %49 = tpu.concatenate %36, %40, %44, %48 in 0 : vector<2x32xf32>, vector<2x32xf32>, vector<2x32xf32>, vector<2x32xf32> -> vector<8x32xf32>
    %50 = arith.index_cast %30 : i32 to index
    %c0_20 = arith.constant 0 : index
    %51 = vector.load %arg8[%50, %c0_20] : memref<32x32xf32, #tpu.memory_space<vmem>>, vector<8x32xf32>
    tpu.vector_store %arg8[%50, %c0_20], %49 {strides = array<i32>} : memref<32x32xf32, #tpu.memory_space<vmem>>, vector<8x32xf32>,
    %c2_i32 = arith.constant 2 : i32
    %c8_i32_21 = arith.constant 8 : i32
    %52 = arith.muli %c2_i32, %c8_i32_21 : i32
    %53 = tpu.assume_multiple %52, 8 : i32
    %54 = arith.index_cast %53 : i32 to index
    %c0_22 = arith.constant 0 : index
    %55 = vector.load %arg8[%54, %c0_22] : memref<32x32xf32, #tpu.memory_space<vmem>>, vector<8x32xf32>
    %56 = vector.extract_strided_slice %55 {offsets = [0, 0], sizes = [2, 32], strides = [1, 1]} : vector<8x32xf32> to vector<2x32xf32>
    %cst_23 = arith.constant dense<0.000000e+00> : vector<2x32xf32>
    %57 = tpu.matmul %48, %0, %cst_23 {dimension_numbers = #tpu.dot_dimension_numbers<[1], [0], [0], [1], [0, 0, 1, 1], [], []>} : vector<2x32xf32>, vector<32x32xf32>, vector<2x32xf32> -> vector<2x32xf32>
    %58 = arith.addf %56, %57 : vector<2x32xf32>
    %59 = math.tanh %58 : vector<2x32xf32>
    %60 = vector.extract_strided_slice %55 {offsets = [2, 0], sizes = [2, 32], strides = [1, 1]} : vector<8x32xf32> to vector<2x32xf32>
    %cst_24 = arith.constant dense<0.000000e+00> : vector<2x32xf32>
    %61 = tpu.matmul %59, %0, %cst_24 {dimension_numbers = #tpu.dot_dimension_numbers<[1], [0], [0], [1], [0, 0, 1, 1], [], []>} : vector<2x32xf32>, vector<32x32xf32>, vector<2x32xf32> -> vector<2x32xf32>
    %62 = arith.addf %60, %61 : vector<2x32xf32>
    %63 = math.tanh %62 : vector<2x32xf32>
    %64 = vector.extract_strided_slice %55 {offsets = [4, 0], sizes = [2, 32], strides = [1, 1]} : vector<8x32xf32> to vector<2x32xf32>
    %cst_25 = arith.constant dense<0.000000e+00> : vector<2x32xf32>
    %65 = tpu.matmul %63, %0, %cst_25 {dimension_numbers = #tpu.dot_dimension_numbers<[1], [0], [0], [1], [0, 0, 1, 1], [], []>} : vector<2x32xf32>, vector<32x32xf32>, vector<2x32xf32> -> vector<2x32xf32>
    %66 = arith.addf %64, %65 : vector<2x32xf32>
    %67 = math.tanh %66 : vector<2x32xf32>
    %68 = vector.extract_strided_slice %55 {offsets = [6, 0], sizes = [2, 32], strides = [1, 1]} : vector<8x32xf32> to vector<2x32xf32>
    %cst_26 = arith.constant dense<0.000000e+00> : vector<2x32xf32>
    %69 = tpu.matmul %67, %0, %cst_26 {dimension_numbers = #tpu.dot_dimension_numbers<[1], [0], [0], [1], [0, 0, 1, 1], [], []>} : vector<2x32xf32>, vector<32x32xf32>, vector<2x32xf32> -> vector<2x32xf32>
    %70 = arith.addf %68, %69 : vector<2x32xf32>
    %71 = math.tanh %70 : vector<2x32xf32>
    %72 = tpu.concatenate %59, %63, %67, %71 in 0 : vector<2x32xf32>, vector<2x32xf32>, vector<2x32xf32>, vector<2x32xf32> -> vector<8x32xf32>
    %73 = arith.index_cast %53 : i32 to index
    %c0_27 = arith.constant 0 : index
    %74 = vector.load %arg8[%73, %c0_27] : memref<32x32xf32, #tpu.memory_space<vmem>>, vector<8x32xf32>
    tpu.vector_store %arg8[%73, %c0_27], %72 {strides = array<i32>} : memref<32x32xf32, #tpu.memory_space<vmem>>, vector<8x32xf32>,
    %c3_i32 = arith.constant 3 : i32
    %c8_i32_28 = arith.constant 8 : i32
    %75 = arith.muli %c3_i32, %c8_i32_28 : i32
    %76 = tpu.assume_multiple %75, 8 : i32
    %77 = arith.index_cast %76 : i32 to index
    %c0_29 = arith.constant 0 : index
    %78 = vector.load %arg8[%77, %c0_29] : memref<32x32xf32, #tpu.memory_space<vmem>>, vector<8x32xf32>
    %79 = vector.extract_strided_slice %78 {offsets = [0, 0], sizes = [2, 32], strides = [1, 1]} : vector<8x32xf32> to vector<2x32xf32>
    %cst_30 = arith.constant dense<0.000000e+00> : vector<2x32xf32>
    %80 = tpu.matmul %71, %0, %cst_30 {dimension_numbers = #tpu.dot_dimension_numbers<[1], [0], [0], [1], [0, 0, 1, 1], [], []>} : vector<2x32xf32>, vector<32x32xf32>, vector<2x32xf32> -> vector<2x32xf32>
    %81 = arith.addf %79, %80 : vector<2x32xf32>
    %82 = math.tanh %81 : vector<2x32xf32>
    %83 = vector.extract_strided_slice %78 {offsets = [2, 0], sizes = [2, 32], strides = [1, 1]} : vector<8x32xf32> to vector<2x32xf32>
    %cst_31 = arith.constant dense<0.000000e+00> : vector<2x32xf32>
    %84 = tpu.matmul %82, %0, %cst_31 {dimension_numbers = #tpu.dot_dimension_numbers<[1], [0], [0], [1], [0, 0, 1, 1], [], []>} : vector<2x32xf32>, vector<32x32xf32>, vector<2x32xf32> -> vector<2x32xf32>
    %85 = arith.addf %83, %84 : vector<2x32xf32>
    %86 = math.tanh %85 : vector<2x32xf32>
    %87 = vector.extract_strided_slice %78 {offsets = [4, 0], sizes = [2, 32], strides = [1, 1]} : vector<8x32xf32> to vector<2x32xf32>
    %cst_32 = arith.constant dense<0.000000e+00> : vector<2x32xf32>
    %88 = tpu.matmul %86, %0, %cst_32 {dimension_numbers = #tpu.dot_dimension_numbers<[1], [0], [0], [1], [0, 0, 1, 1], [], []>} : vector<2x32xf32>, vector<32x32xf32>, vector<2x32xf32> -> vector<2x32xf32>
    %89 = arith.addf %87, %88 : vector<2x32xf32>
    %90 = math.tanh %89 : vector<2x32xf32>
    %91 = vector.extract_strided_slice %78 {offsets = [6, 0], sizes = [2, 32], strides = [1, 1]} : vector<8x32xf32> to vector<2x32xf32>
    %cst_33 = arith.constant dense<0.000000e+00> : vector<2x32xf32>
    %92 = tpu.matmul %90, %0, %cst_33 {dimension_numbers = #tpu.dot_dimension_numbers<[1], [0], [0], [1], [0, 0, 1, 1], [], []>} : vector<2x32xf32>, vector<32x32xf32>, vector<2x32xf32> -> vector<2x32xf32>
    %93 = arith.addf %91, %92 : vector<2x32xf32>
    %94 = math.tanh %93 : vector<2x32xf32>
    %95 = tpu.concatenate %82, %86, %90, %94 in 0 : vector<2x32xf32>, vector<2x32xf32>, vector<2x32xf32>, vector<2x32xf32> -> vector<8x32xf32>
    %96 = arith.index_cast %76 : i32 to index
    %c0_34 = arith.constant 0 : index
    %97 = vector.load %arg8[%96, %c0_34] : memref<32x32xf32, #tpu.memory_space<vmem>>, vector<8x32xf32>
    tpu.vector_store %arg8[%96, %c0_34], %95 {strides = array<i32>} : memref<32x32xf32, #tpu.memory_space<vmem>>, vector<8x32xf32>,
    %c4_i32 = arith.constant 4 : i32
    %c0_35 = arith.constant 0 : index
    %c0_36 = arith.constant 0 : index
    %98 = vector.load %arg3[%c0_35, %c0_36] : memref<32x8xf32, #tpu.memory_space<vmem>>, vector<32x8xf32>
    %c0_37 = arith.constant 0 : index
    %c0_38 = arith.constant 0 : index
    %99 = vector.load %arg4[%c0_37, %c0_38] : memref<3x8xf32, #tpu.memory_space<vmem>>, vector<1x8xf32>
    %c1 = arith.constant 1 : index
    %c0_39 = arith.constant 0 : index
    %100 = vector.load %arg4[%c1, %c0_39] : memref<3x8xf32, #tpu.memory_space<vmem>>, vector<1x8xf32>
    %c2 = arith.constant 2 : index
    %c0_40 = arith.constant 0 : index
    %101 = vector.load %arg4[%c2, %c0_40] : memref<3x8xf32, #tpu.memory_space<vmem>>, vector<1x8xf32>
    %cst_41 = arith.constant 0.000000e+00 : f32
    %102 = vector.broadcast %cst_41 : f32 to vector<8x3xf32>
    %c0_i32_42 = arith.constant 0 : i32
    %c8_i32_43 = arith.constant 8 : i32
    %103 = arith.muli %c0_i32_42, %c8_i32_43 : i32
    %104 = tpu.assume_multiple %103, 8 : i32
    %105 = arith.index_cast %104 : i32 to index
    %c0_44 = arith.constant 0 : index
    %106 = vector.load %arg8[%105, %c0_44] : memref<32x32xf32, #tpu.memory_space<vmem>>, vector<8x32xf32>
    %cst_45 = arith.constant dense<0.000000e+00> : vector<8x8xf32>
    %107 = tpu.matmul %106, %98, %cst_45 {dimension_numbers = #tpu.dot_dimension_numbers<[1], [0], [0], [1], [0, 0, 1, 1], [], []>} : vector<8x32xf32>, vector<32x8xf32>, vector<8x8xf32> -> vector<8x8xf32>
    %108 = vector.broadcast %99 : vector<1x8xf32> to vector<8x8xf32>
    %109 = arith.addf %107, %108 : vector<8x8xf32>
    %cst_46 = arith.constant 0.000000e+00 : f32
    %110 = vector.broadcast %cst_46 : f32 to vector<8x8xf32>
    %111 = arith.cmpf ogt, %109, %110 : vector<8x8xf32>
    %cst_47 = arith.constant 0.000000e+00 : f32
    %112 = vector.broadcast %cst_47 : f32 to vector<8x8xf32>
    %113 = arith.minimumf %109, %112 : vector<8x8xf32>
    %114 = math.exp %113 : vector<8x8xf32>
    %cst_48 = arith.constant 1.000000e+00 : f32
    %115 = vector.broadcast %cst_48 : f32 to vector<8x8xf32>
    %116 = arith.subf %114, %115 : vector<8x8xf32>
    %117 = arith.select %111, %109, %116 : vector<8x8xi1>, vector<8x8xf32>
    %118 = vector.broadcast %100 : vector<1x8xf32> to vector<8x8xf32>
    %119 = arith.mulf %117, %118 : vector<8x8xf32>
    %120 = vector.broadcast %101 : vector<1x8xf32> to vector<8x8xf32>
    %121 = arith.addf %119, %120 : vector<8x8xf32>
    %122 = arith.index_cast %c0_i32_42 : i32 to index
    %c0_49 = arith.constant 0 : index
    %c0_50 = arith.constant 0 : index
    %123 = vector.load %arg5[%122, %c0_49, %c0_50] : memref<4x8x3xf32, #tpu.memory_space<vmem>>, vector<1x8x3xf32>
    %124 = vector.shape_cast %123 : vector<1x8x3xf32> to vector<8x3xf32>
    %cst_51 = arith.constant dense<0.000000e+00> : vector<8x3xf32>
    %125 = tpu.matmul %121, %124, %cst_51 {dimension_numbers = #tpu.dot_dimension_numbers<[1], [0], [0], [1], [0, 0, 1, 1], [], []>} : vector<8x8xf32>, vector<8x3xf32>, vector<8x3xf32> -> vector<8x3xf32>
    %126 = arith.addf %102, %125 : vector<8x3xf32>
    %c1_i32_52 = arith.constant 1 : i32
    %c8_i32_53 = arith.constant 8 : i32
    %127 = arith.muli %c1_i32_52, %c8_i32_53 : i32
    %128 = tpu.assume_multiple %127, 8 : i32
    %129 = arith.index_cast %128 : i32 to index
    %c0_54 = arith.constant 0 : index
    %130 = vector.load %arg8[%129, %c0_54] : memref<32x32xf32, #tpu.memory_space<vmem>>, vector<8x32xf32>
    %cst_55 = arith.constant dense<0.000000e+00> : vector<8x8xf32>
    %131 = tpu.matmul %130, %98, %cst_55 {dimension_numbers = #tpu.dot_dimension_numbers<[1], [0], [0], [1], [0, 0, 1, 1], [], []>} : vector<8x32xf32>, vector<32x8xf32>, vector<8x8xf32> -> vector<8x8xf32>
    %132 = vector.broadcast %99 : vector<1x8xf32> to vector<8x8xf32>
    %133 = arith.addf %131, %132 : vector<8x8xf32>
    %cst_56 = arith.constant 0.000000e+00 : f32
    %134 = vector.broadcast %cst_56 : f32 to vector<8x8xf32>
    %135 = arith.cmpf ogt, %133, %134 : vector<8x8xf32>
    %cst_57 = arith.constant 0.000000e+00 : f32
    %136 = vector.broadcast %cst_57 : f32 to vector<8x8xf32>
    %137 = arith.minimumf %133, %136 : vector<8x8xf32>
    %138 = math.exp %137 : vector<8x8xf32>
    %cst_58 = arith.constant 1.000000e+00 : f32
    %139 = vector.broadcast %cst_58 : f32 to vector<8x8xf32>
    %140 = arith.subf %138, %139 : vector<8x8xf32>
    %141 = arith.select %135, %133, %140 : vector<8x8xi1>, vector<8x8xf32>
    %142 = vector.broadcast %100 : vector<1x8xf32> to vector<8x8xf32>
    %143 = arith.mulf %141, %142 : vector<8x8xf32>
    %144 = vector.broadcast %101 : vector<1x8xf32> to vector<8x8xf32>
    %145 = arith.addf %143, %144 : vector<8x8xf32>
    %146 = arith.index_cast %c1_i32_52 : i32 to index
    %c0_59 = arith.constant 0 : index
    %c0_60 = arith.constant 0 : index
    %147 = vector.load %arg5[%146, %c0_59, %c0_60] : memref<4x8x3xf32, #tpu.memory_space<vmem>>, vector<1x8x3xf32>
    %148 = vector.shape_cast %147 : vector<1x8x3xf32> to vector<8x3xf32>
    %cst_61 = arith.constant dense<0.000000e+00> : vector<8x3xf32>
    %149 = tpu.matmul %145, %148, %cst_61 {dimension_numbers = #tpu.dot_dimension_numbers<[1], [0], [0], [1], [0, 0, 1, 1], [], []>} : vector<8x8xf32>, vector<8x3xf32>, vector<8x3xf32> -> vector<8x3xf32>
    %150 = arith.addf %126, %149 : vector<8x3xf32>
    %c2_i32_62 = arith.constant 2 : i32
    %c8_i32_63 = arith.constant 8 : i32
    %151 = arith.muli %c2_i32_62, %c8_i32_63 : i32
    %152 = tpu.assume_multiple %151, 8 : i32
    %153 = arith.index_cast %152 : i32 to index
    %c0_64 = arith.constant 0 : index
    %154 = vector.load %arg8[%153, %c0_64] : memref<32x32xf32, #tpu.memory_space<vmem>>, vector<8x32xf32>
    %cst_65 = arith.constant dense<0.000000e+00> : vector<8x8xf32>
    %155 = tpu.matmul %154, %98, %cst_65 {dimension_numbers = #tpu.dot_dimension_numbers<[1], [0], [0], [1], [0, 0, 1, 1], [], []>} : vector<8x32xf32>, vector<32x8xf32>, vector<8x8xf32> -> vector<8x8xf32>
    %156 = vector.broadcast %99 : vector<1x8xf32> to vector<8x8xf32>
    %157 = arith.addf %155, %156 : vector<8x8xf32>
    %cst_66 = arith.constant 0.000000e+00 : f32
    %158 = vector.broadcast %cst_66 : f32 to vector<8x8xf32>
    %159 = arith.cmpf ogt, %157, %158 : vector<8x8xf32>
    %cst_67 = arith.constant 0.000000e+00 : f32
    %160 = vector.broadcast %cst_67 : f32 to vector<8x8xf32>
    %161 = arith.minimumf %157, %160 : vector<8x8xf32>
    %162 = math.exp %161 : vector<8x8xf32>
    %cst_68 = arith.constant 1.000000e+00 : f32
    %163 = vector.broadcast %cst_68 : f32 to vector<8x8xf32>
    %164 = arith.subf %162, %163 : vector<8x8xf32>
    %165 = arith.select %159, %157, %164 : vector<8x8xi1>, vector<8x8xf32>
    %166 = vector.broadcast %100 : vector<1x8xf32> to vector<8x8xf32>
    %167 = arith.mulf %165, %166 : vector<8x8xf32>
    %168 = vector.broadcast %101 : vector<1x8xf32> to vector<8x8xf32>
    %169 = arith.addf %167, %168 : vector<8x8xf32>
    %170 = arith.index_cast %c2_i32_62 : i32 to index
    %c0_69 = arith.constant 0 : index
    %c0_70 = arith.constant 0 : index
    %171 = vector.load %arg5[%170, %c0_69, %c0_70] : memref<4x8x3xf32, #tpu.memory_space<vmem>>, vector<1x8x3xf32>
    %172 = vector.shape_cast %171 : vector<1x8x3xf32> to vector<8x3xf32>
    %cst_71 = arith.constant dense<0.000000e+00> : vector<8x3xf32>
    %173 = tpu.matmul %169, %172, %cst_71 {dimension_numbers = #tpu.dot_dimension_numbers<[1], [0], [0], [1], [0, 0, 1, 1], [], []>} : vector<8x8xf32>, vector<8x3xf32>, vector<8x3xf32> -> vector<8x3xf32>
    %174 = arith.addf %150, %173 : vector<8x3xf32>
    %c3_i32_72 = arith.constant 3 : i32
    %c8_i32_73 = arith.constant 8 : i32
    %175 = arith.muli %c3_i32_72, %c8_i32_73 : i32
    %176 = tpu.assume_multiple %175, 8 : i32
    %177 = arith.index_cast %176 : i32 to index
    %c0_74 = arith.constant 0 : index
    %178 = vector.load %arg8[%177, %c0_74] : memref<32x32xf32, #tpu.memory_space<vmem>>, vector<8x32xf32>
    %cst_75 = arith.constant dense<0.000000e+00> : vector<8x8xf32>
    %179 = tpu.matmul %178, %98, %cst_75 {dimension_numbers = #tpu.dot_dimension_numbers<[1], [0], [0], [1], [0, 0, 1, 1], [], []>} : vector<8x32xf32>, vector<32x8xf32>, vector<8x8xf32> -> vector<8x8xf32>
    %180 = vector.broadcast %99 : vector<1x8xf32> to vector<8x8xf32>
    %181 = arith.addf %179, %180 : vector<8x8xf32>
    %cst_76 = arith.constant 0.000000e+00 : f32
    %182 = vector.broadcast %cst_76 : f32 to vector<8x8xf32>
    %183 = arith.cmpf ogt, %181, %182 : vector<8x8xf32>
    %cst_77 = arith.constant 0.000000e+00 : f32
    %184 = vector.broadcast %cst_77 : f32 to vector<8x8xf32>
    %185 = arith.minimumf %181, %184 : vector<8x8xf32>
    %186 = math.exp %185 : vector<8x8xf32>
    %cst_78 = arith.constant 1.000000e+00 : f32
    %187 = vector.broadcast %cst_78 : f32 to vector<8x8xf32>
    %188 = arith.subf %186, %187 : vector<8x8xf32>
    %189 = arith.select %183, %181, %188 : vector<8x8xi1>, vector<8x8xf32>
    %190 = vector.broadcast %100 : vector<1x8xf32> to vector<8x8xf32>
    %191 = arith.mulf %189, %190 : vector<8x8xf32>
    %192 = vector.broadcast %101 : vector<1x8xf32> to vector<8x8xf32>
    %193 = arith.addf %191, %192 : vector<8x8xf32>
    %194 = arith.index_cast %c3_i32_72 : i32 to index
    %c0_79 = arith.constant 0 : index
    %c0_80 = arith.constant 0 : index
    %195 = vector.load %arg5[%194, %c0_79, %c0_80] : memref<4x8x3xf32, #tpu.memory_space<vmem>>, vector<1x8x3xf32>
    %196 = vector.shape_cast %195 : vector<1x8x3xf32> to vector<8x3xf32>
    %cst_81 = arith.constant dense<0.000000e+00> : vector<8x3xf32>
    %197 = tpu.matmul %193, %196, %cst_81 {dimension_numbers = #tpu.dot_dimension_numbers<[1], [0], [0], [1], [0, 0, 1, 1], [], []>} : vector<8x8xf32>, vector<8x3xf32>, vector<8x3xf32> -> vector<8x3xf32>
    %198 = arith.addf %174, %197 : vector<8x3xf32>
    %c4_i32_82 = arith.constant 4 : i32
    %199 = tpu.iota {dimensions = array<i32: 1>} : vector<2x8xi32>
    %c2_i32_83 = arith.constant 2 : i32
    %c0_i32_84 = arith.constant 0 : i32
    %200 = arith.cmpi eq, %c2_i32_83, %c0_i32_84 : i32
    %c1_i32_85 = arith.constant 1 : i32
    %201 = arith.select %200, %c1_i32_85, %c2_i32_83 : i32
    %202 = vector.broadcast %201 : i32 to vector<2x8xi32>
    %203 = arith.remsi %199, %202 : vector<2x8xi32>
    %c0_i32_86 = arith.constant 0 : i32
    %204 = vector.broadcast %c0_i32_86 : i32 to vector<2x8xi32>
    %205 = arith.cmpi ne, %203, %204 : vector<2x8xi32>
    %c0_i32_87 = arith.constant 0 : i32
    %206 = vector.broadcast %c0_i32_87 : i32 to vector<2x8xi32>
    %207 = arith.cmpi slt, %203, %206 : vector<2x8xi32>
    %c0_i32_88 = arith.constant 0 : i32
    %208 = arith.cmpi slt, %201, %c0_i32_88 : i32
    %209 = vector.broadcast %208 : i1 to vector<2x8xi1>
    %210 = vector.broadcast %209 : vector<2x8xi1> to vector<2x8xi1>
    %211 = arith.xori %207, %210 : vector<2x8xi1>
    %212 = arith.andi %211, %205 : vector<2x8xi1>
    %213 = vector.broadcast %201 : i32 to vector<2x8xi32>
    %214 = arith.addi %203, %213 : vector<2x8xi32>
    %215 = arith.select %212, %214, %203 : vector<2x8xi1>, vector<2x8xi32>
    %216 = tpu.iota {dimensions = array<i32: 0>} : vector<2x8xi32>
    %217 = arith.cmpi eq, %215, %216 : vector<2x8xi32>
    %218 = arith.extui %217 : vector<2x8xi1> to vector<2x8xi32>
    %219 = arith.sitofp %218 : vector<2x8xi32> to vector<2x8xf32>
    %cst_89 = arith.constant dense<0.000000e+00> : vector<2x3xf32>
    %220 = tpu.matmul %219, %198, %cst_89 {dimension_numbers = #tpu.dot_dimension_numbers<[1], [0], [0], [1], [0, 0, 1, 1], [], []>} : vector<2x8xf32>, vector<8x3xf32>, vector<2x3xf32> -> vector<2x3xf32>
    %c0_90 = arith.constant 0 : index
    %c0_91 = arith.constant 0 : index
    %221 = vector.load %arg6[%c0_90, %c0_91] : memref<1x3xf32, #tpu.memory_space<vmem>>, vector<1x3xf32>
    %222 = vector.broadcast %221 : vector<1x3xf32> to vector<2x3xf32>
    %223 = arith.addf %220, %222 : vector<2x3xf32>
    %c0_92 = arith.constant 0 : index
    %c0_93 = arith.constant 0 : index
    %224 = vector.load %arg7[%c0_92, %c0_93] : memref<2x3xf32, #tpu.memory_space<vmem>>, vector<2x3xf32>
    tpu.vector_store %arg7[%c0_92, %c0_93], %223 {strides = array<i32>} : memref<2x3xf32, #tpu.memory_space<vmem>>, vector<2x3xf32>,
    return
  }
}

</mosaic_0001>

<llo_original>
// kernel: tpu_custom_call.1
$region0: #{tpu_custom_call.1}
  #allocation0 [shape = 'u32[]', space=smem, size = 0x4, offset = 0x4, fixed_abs, tag = 'smem constant byte address 0x4 - core index']
  #allocation1 [shape = 'u32[144,128]{1,0:T(1,128)}', space=vmem, size = 0x12000, scoped, tag = 'internal scratch']
  #allocation2 [shape = 'f32[32,32]{1,0:T(8,128)}', space=vmem, size = 0x4000, scoped, tag = 'scratch operand']
  %s0 = inlined_call_operand.vmem [shape: f32[32,5], index: 0, kind: input, shape index: {}]
  %s1 = inlined_call_operand.vmem [shape: f32[5,32], index: 1, kind: input, shape index: {}]
  %s2 = inlined_call_operand.vmem [shape: f32[32,32], index: 2, kind: input, shape index: {}]
  %s3 = inlined_call_operand.vmem [shape: f32[32,8], index: 3, kind: input, shape index: {}]
  %s4 = inlined_call_operand.vmem [shape: f32[3,8], index: 4, kind: input, shape index: {}]
  %s5 = inlined_call_operand.vmem [shape: f32[4,8,3], index: 5, kind: input, shape index: {}]
  %s6 = inlined_call_operand.vmem [shape: f32[1,3], index: 6, kind: input, shape index: {}]
  %s7 = inlined_call_operand.hbm [shape: f32[2,3], index: 7, kind: output, shape index: {}]
  %s8 = sld [smem:[#allocation0]]
  $region38: #{tpu_custom_call.1} parent=0
    _
  %s10 = ssub.s32 1, %s8
  %s11 = scalar_select 0, %s10, %s8
  $region1: #{tpu_custom_call.1} parent=0
    #allocation3 [shape = 'u8[1024]{0}', space=vmem, size = 0x400, scoped, tag = 'output window, operand 0, single buffered']
    #allocation4 [shape = 's32[1]{0}', space=sflag, size = 0x4, scoped, tag = 'scoped memory for tpu_custom_call.1']
    %12 = vsyncpa [#allocation4], 0
    // Predicated region
    $region2: #{tpu_custom_call.1} parent=1 // pred_check
      _
    $region3: #{tpu_custom_call.1} parent=1 // pred_check_branch
      %14 = sbr.rel (0) target = $region5
    $region4: #{tpu_custom_call.1} parent=1 // pred_region
      _
    $region5: #{tpu_custom_call.1} parent=1 // pred_fallthru
      _
    // Predicated region
    $region6: #{tpu_custom_call.1} parent=1 // pred_check
      _
    $region7: #{tpu_custom_call.1} parent=1 // pred_check_branch
      %16 = sbr.rel (0) target = $region9
    $region8: #{tpu_custom_call.1} parent=1 // pred_region
      _
    $region9: #{tpu_custom_call.1} parent=1 // pred_fallthru
      _
    // Predicated region
    $region10: #{tpu_custom_call.1} parent=1 // pred_check
      _
    $region11: #{tpu_custom_call.1} parent=1 // pred_check_branch
      %18 = sbr.rel (0) target = $region13
    $region12: #{tpu_custom_call.1} parent=1 // pred_region
      _
    $region13: #{tpu_custom_call.1} parent=1 // pred_fallthru
      _
    // Predicated region
    $region14: #{tpu_custom_call.1} parent=1 // pred_check
      _
    $region15: #{tpu_custom_call.1} parent=1 // pred_check_branch
      %20 = sbr.rel (0) target = $region17
    $region16: #{tpu_custom_call.1} parent=1 // pred_region
      _
    $region17: #{tpu_custom_call.1} parent=1 // pred_fallthru
      _
    // Predicated region
    $region18: #{tpu_custom_call.1} parent=1 // pred_check
      _
    $region19: #{tpu_custom_call.1} parent=1 // pred_check_branch
      %22 = sbr.rel (0) target = $region21
    $region20: #{tpu_custom_call.1} parent=1 // pred_region
      _
    $region21: #{tpu_custom_call.1} parent=1 // pred_fallthru
      _
    // Predicated region
    $region22: #{tpu_custom_call.1} parent=1 // pred_check
      _
    $region23: #{tpu_custom_call.1} parent=1 // pred_check_branch
      %24 = sbr.rel (0) target = $region25
    $region24: #{tpu_custom_call.1} parent=1 // pred_region
      _
    $region25: #{tpu_custom_call.1} parent=1 // pred_fallthru
      _
    // Predicated region
    $region26: #{tpu_custom_call.1} parent=1 // pred_check
      _
    $region27: #{tpu_custom_call.1} parent=1 // pred_check_branch
      %26 = sbr.rel (0) target = $region29
    $region28: #{tpu_custom_call.1} parent=1 // pred_region
      _
    $region29: #{tpu_custom_call.1} parent=1 // pred_fallthru
      _
    %v27 = vld [vmem:[%s2] sm:$0xff]
    %v28 = vld [vmem:[%s2 + $0x8] sm:$0xff]
    %v29 = vld [vmem:[%s2 + $0x10] sm:$0xff]
    %v30 = vld [vmem:[%s2 + $0x18] sm:$0xff]
    %v31 = vld [vmem:[%s0] sm:$0xff]
    %v32 = vld [vmem:[%s0 + $0x8] sm:$0xff]
    %v33 = vld [vmem:[%s0 + $0x10] sm:$0xff]
    %v34 = vld [vmem:[%s0 + $0x18] sm:$0xff]
    %v35 = vld [vmem:[%s1] sm:$0x1f]
    %vm36 = vcmask 39936
    %v38 = vsel %vm36, %v31, 0
    %v41 = vsel %vm36, %v32, 0
    %v44 = vsel %vm36, %v33, 0
    %v47 = vsel %vm36, %v34, 0
    %vm49 = vcmask 1044480
    %v51 = vsel %vm49, %v35, 0
    %53 = vmatprep.subr.mxu0 0.0
    %54 = vmatpush1.msra.mxu0 %v51
    %55 = vmatprep.subr.mxu0 0.0
    %56 = vmatpush1.msra.mxu0 0.0
    %57 = vmatprep.subr.mxu0 0.0
    %58 = vmatpush1.msra.mxu0 0.0
    %59 = vmatprep.subr.mxu0 0.0
    %60 = vmatpush1.msra.mxu0 0.0
    %61 = vmatprep.subr.mxu0 0.0
    %62 = vmatpush1.msra.mxu0 0.0
    %63 = vmatprep.subr.mxu0 0.0
    %64 = vmatpush1.msra.mxu0 0.0
    %65 = vmatprep.subr.mxu0 0.0
    %66 = vmatpush1.msra.mxu0 0.0
    %67 = vmatprep.subr.mxu0 0.0
    %68 = vmatpush1.msra.mxu0 0.0
    %69 = vmatprep.subr.mxu0 0.0
    %70 = vmatpush1.msra.mxu0 0.0
    %71 = vmatprep.subr.mxu0 0.0
    %72 = vmatpush1.msra.mxu0 0.0
    %73 = vmatprep.subr.mxu0 0.0
    %74 = vmatpush1.msra.mxu0 0.0
    %75 = vmatprep.subr.mxu0 0.0
    %76 = vmatpush1.msra.mxu0 0.0
    %77 = vmatprep.subr.mxu0 0.0
    %78 = vmatpush1.msra.mxu0 0.0
    %79 = vmatprep.subr.mxu0 0.0
    %80 = vmatpush1.msra.mxu0 0.0
    %81 = vmatprep.subr.mxu0 0.0
    %82 = vmatpush1.msra.mxu0 0.0
    %83 = vmatprep.subr.mxu0 0.0
    %84 = vmatpush1.msra.mxu0 0.0
    %85 = vmatprep.subr.mxu0 0.0
    %86 = vmatpush1.msra.mxu0 0.0
    %87 = vmatprep.subr.mxu0 0.0
    %88 = vmatpush1.msra.mxu0 0.0
    %89 = vmatprep.subr.mxu0 0.0
    %90 = vmatpush1.msra.mxu0 0.0
    %91 = vmatprep.subr.mxu0 0.0
    %92 = vmatpush1.msra.mxu0 0.0
    %93 = vmatprep.subr.mxu0 0.0
    %94 = vmatpush1.msra.mxu0 0.0
    %95 = vmatprep.subr.mxu0 0.0
    %96 = vmatpush1.msra.mxu0 0.0
    %97 = vmatprep.subr.mxu0 0.0
    %98 = vmatpush1.msra.mxu0 0.0
    %99 = vmatprep.subr.mxu0 0.0
    %100 = vmatpush1.msra.mxu0 0.0
    %101 = vmatprep.subr.mxu0 0.0
    %102 = vmatpush1.msra.mxu0 0.0
    %103 = vmatprep.subr.mxu0 0.0
    %104 = vmatpush1.msra.mxu0 0.0
    %105 = vmatprep.subr.mxu0 0.0
    %106 = vmatpush1.msra.mxu0 0.0
    %107 = vmatprep.subr.mxu0 0.0
    %108 = vmatpush1.msra.mxu0 0.0
    %109 = vmatprep.subr.mxu0 0.0
    %110 = vmatpush1.msra.mxu0 0.0
    %111 = vmatprep.subr.mxu0 0.0
    %112 = vmatpush1.msra.mxu0 0.0
    %113 = vmatprep.subr.mxu0 0.0
    %114 = vmatpush1.msra.mxu0 0.0
    %115 = vmatprep.subr.mxu0 0.0
    %116 = vmatpush1.msra.mxu0 0.0
    %117 = vmatprep.mubr.f32.mxu0 0.0
    %118 = vmatmul.mubr.f32.gmra.mrb[0].mxu0 %v38
    %v119 = vpop.f32.mrb[0].mxu0
    %v120 = vadd.f32 0.0, %v119
    %v121 = vpop.f32.mrb[0].mxu0
    %122 = vmatprep.mubr.f32.mxu0 0.0
    %123 = vmatmul.mubr.f32.gmra.mrb[0].mxu0 %v41
    %v124 = vpop.f32.mrb[0].mxu0
    %v125 = vadd.f32 0.0, %v124
    %v126 = vpop.f32.mrb[0].mxu0
    %127 = vmatprep.mubr.f32.mxu0 0.0
    %128 = vmatmul.mubr.f32.gmra.mrb[0].mxu0 %v44
    %v129 = vpop.f32.mrb[0].mxu0
    %v130 = vadd.f32 0.0, %v129
    %v131 = vpop.f32.mrb[0].mxu0
    %132 = vmatprep.mubr.f32.mxu0 0.0
    %133 = vmatmul.mubr.f32.gmra.mrb[0].mxu0 %v47
    %v134 = vpop.f32.mrb[0].mxu0
    %v135 = vadd.f32 0.0, %v134
    %v136 = vpop.f32.mrb[0].mxu0
    %137 = vdwg.mxu0
    %vm138 = vcmask 261120
    %139 = vst.msk [vmem:[#allocation2] sm:$0xff] %vm138, %v120
    %140 = vst.msk [vmem:[#allocation2 + $0x8] sm:$0xff] %vm138, %v125
    %141 = vst.msk [vmem:[#allocation2 + $0x10] sm:$0xff] %vm138, %v130
    %142 = vst.msk [vmem:[#allocation2 + $0x18] sm:$0xff] %vm138, %v135
    %v143 = vld [vmem:[#allocation2] sm:$0xff]
    %v145 = vsel %vm138, 0.0, 0
    %147 = vmatprep.subr.mxu0 0.0
    %148 = vmatpush1.msra.mxu0 %v27
    %149 = vmatprep.subr.mxu0 0.0
    %150 = vmatpush1.msra.mxu0 %v28
    %151 = vmatprep.subr.mxu0 0.0
    %152 = vmatpush1.msra.mxu0 %v29
    %153 = vmatprep.subr.mxu0 0.0
    %154 = vmatpush1.msra.mxu0 %v30
    %155 = vmatprep.subr.mxu0 0.0
    %156 = vmatpush1.msra.mxu0 0.0
    %157 = vmatprep.subr.mxu0 0.0
    %158 = vmatpush1.msra.mxu0 0.0
    %159 = vmatprep.subr.mxu0 0.0
    %160 = vmatpush1.msra.mxu0 0.0
    %161 = vmatprep.subr.mxu0 0.0
    %162 = vmatpush1.msra.mxu0 0.0
    %163 = vmatprep.subr.mxu0 0.0
    %164 = vmatpush1.msra.mxu0 0.0
    %165 = vmatprep.subr.mxu0 0.0
    %166 = vmatpush1.msra.mxu0 0.0
    %167 = vmatprep.subr.mxu0 0.0
    %168 = vmatpush1.msra.mxu0 0.0
    %169 = vmatprep.subr.mxu0 0.0
    %170 = vmatpush1.msra.mxu0 0.0
    %171 = vmatprep.subr.mxu0 0.0
    %172 = vmatpush1.msra.mxu0 0.0
    %173 = vmatprep.subr.mxu0 0.0
    %174 = vmatpush1.msra.mxu0 0.0
    %175 = vmatprep.subr.mxu0 0.0
    %176 = vmatpush1.msra.mxu0 0.0
    %177 = vmatprep.subr.mxu0 0.0
    %178 = vmatpush1.msra.mxu0 0.0
    %179 = vmatprep.subr.mxu0 0.0
    %180 = vmatpush1.msra.mxu0 0.0
    %181 = vmatprep.subr.mxu0 0.0
    %182 = vmatpush1.msra.mxu0 0.0
    %183 = vmatprep.subr.mxu0 0.0
    %184 = vmatpush1.msra.mxu0 0.0
    %185 = vmatprep.subr.mxu0 0.0
    %186 = vmatpush1.msra.mxu0 0.0
    %187 = vmatprep.subr.mxu0 0.0
    %188 = vmatpush1.msra.mxu0 0.0
    %189 = vmatprep.subr.mxu0 0.0
    %190 = vmatpush1.msra.mxu0 0.0
    %191 = vmatprep.subr.mxu0 0.0
    %192 = vmatpush1.msra.mxu0 0.0
    %193 = vmatprep.subr.mxu0 0.0
    %194 = vmatpush1.msra.mxu0 0.0
    %195 = vmatprep.subr.mxu0 0.0
    %196 = vmatpush1.msra.mxu0 0.0
    %197 = vmatprep.subr.mxu0 0.0
    %198 = vmatpush1.msra.mxu0 0.0
    %199 = vmatprep.subr.mxu0 0.0
    %200 = vmatpush1.msra.mxu0 0.0
    %201 = vmatprep.subr.mxu0 0.0
    %202 = vmatpush1.msra.mxu0 0.0
    %203 = vmatprep.subr.mxu0 0.0
    %204 = vmatpush1.msra.mxu0 0.0
    %205 = vmatprep.subr.mxu0 0.0
    %206 = vmatpush1.msra.mxu0 0.0
    %207 = vmatprep.subr.mxu0 0.0
    %208 = vmatpush1.msra.mxu0 0.0
    %209 = vmatprep.subr.mxu0 0.0
    %210 = vmatpush1.msra.mxu0 0.0
    %211 = vmatprep.mubr.f32.mxu0 0.0
    %212 = vmatmul.mubr.f32.gmra.mrb[0].mxu0 %v145
    %v213 = vpop.f32.mrb[0].mxu0
    %v214 = vadd.f32 0.0, %v213
    %v215 = vpop.f32.mrb[0].mxu0
    %216 = vdwg.mxu0
    %v217 = vadd.f32 %v143, %v214
    %v218 = vtanh.pop %v217
    %v220 = vsel %vm138, %v218, 0
    %222 = vmatprep.subr.mxu0 0.0
    %223 = vmatpush1.msra.mxu0 %v27
    %224 = vmatprep.subr.mxu0 0.0
    %225 = vmatpush1.msra.mxu0 %v28
    %226 = vmatprep.subr.mxu0 0.0
    %227 = vmatpush1.msra.mxu0 %v29
    %228 = vmatprep.subr.mxu0 0.0
    %229 = vmatpush1.msra.mxu0 %v30
    %230 = vmatprep.subr.mxu0 0.0
    %231 = vmatpush1.msra.mxu0 0.0
    %232 = vmatprep.subr.mxu0 0.0
    %233 = vmatpush1.msra.mxu0 0.0
    %234 = vmatprep.subr.mxu0 0.0
    %235 = vmatpush1.msra.mxu0 0.0
    %236 = vmatprep.subr.mxu0 0.0
    %237 = vmatpush1.msra.mxu0 0.0
    %238 = vmatprep.subr.mxu0 0.0
    %239 = vmatpush1.msra.mxu0 0.0
    %240 = vmatprep.subr.mxu0 0.0
    %241 = vmatpush1.msra.mxu0 0.0
    %242 = vmatprep.subr.mxu0 0.0
    %243 = vmatpush1.msra.mxu0 0.0
    %244 = vmatprep.subr.mxu0 0.0
    %245 = vmatpush1.msra.mxu0 0.0
    %246 = vmatprep.subr.mxu0 0.0
    %247 = vmatpush1.msra.mxu0 0.0
    %248 = vmatprep.subr.mxu0 0.0
    %249 = vmatpush1.msra.mxu0 0.0
    %250 = vmatprep.subr.mxu0 0.0
    %251 = vmatpush1.msra.mxu0 0.0
    %252 = vmatprep.subr.mxu0 0.0
    %253 = vmatpush1.msra.mxu0 0.0
    %254 = vmatprep.subr.mxu0 0.0
    %255 = vmatpush1.msra.mxu0 0.0
    %256 = vmatprep.subr.mxu0 0.0
    %257 = vmatpush1.msra.mxu0 0.0
    %258 = vmatprep.subr.mxu0 0.0
    %259 = vmatpush1.msra.mxu0 0.0
    %260 = vmatprep.subr.mxu0 0.0
    %261 = vmatpush1.msra.mxu0 0.0
    %262 = vmatprep.subr.mxu0 0.0
    %263 = vmatpush1.msra.mxu0 0.0
    %264 = vmatprep.subr.mxu0 0.0
    %265 = vmatpush1.msra.mxu0 0.0
    %266 = vmatprep.subr.mxu0 0.0
    %267 = vmatpush1.msra.mxu0 0.0
    %268 = vmatprep.subr.mxu0 0.0
    %269 = vmatpush1.msra.mxu0 0.0
    %270 = vmatprep.subr.mxu0 0.0
    %271 = vmatpush1.msra.mxu0 0.0
    %272 = vmatprep.subr.mxu0 0.0
    %273 = vmatpush1.msra.mxu0 0.0
    %274 = vmatprep.subr.mxu0 0.0
    %275 = vmatpush1.msra.mxu0 0.0
    %276 = vmatprep.subr.mxu0 0.0
    %277 = vmatpush1.msra.mxu0 0.0
    %278 = vmatprep.subr.mxu0 0.0
    %279 = vmatpush1.msra.mxu0 0.0
    %280 = vmatprep.subr.mxu0 0.0
    %281 = vmatpush1.msra.mxu0 0.0
    %282 = vmatprep.subr.mxu0 0.0
    %283 = vmatpush1.msra.mxu0 0.0
    %284 = vmatprep.subr.mxu0 0.0
    %285 = vmatpush1.msra.mxu0 0.0
    %286 = vmatprep.mubr.f32.mxu0 0.0
    %287 = vmatmul.mubr.f32.gmra.mrb[0].mxu0 %v220
    %v288 = vpop.f32.mrb[0].mxu0
    %v289 = vadd.f32 0.0, %v288
    %v290 = vpop.f32.mrb[0].mxu0
    %291 = vdwg.mxu0
    %v293 = vrot.slane %v289, 6
    %v295 = vadd.f32 %v143, %v293
    %v296 = vtanh.pop %v295
    %v298 = vrot.slane %v296, 2
    %v299 = vsel %vm138, %v298, 0
    %301 = vmatprep.subr.mxu0 0.0
    %302 = vmatpush1.msra.mxu0 %v27
    %303 = vmatprep.subr.mxu0 0.0
    %304 = vmatpush1.msra.mxu0 %v28
    %305 = vmatprep.subr.mxu0 0.0
    %306 = vmatpush1.msra.mxu0 %v29
    %307 = vmatprep.subr.mxu0 0.0
    %308 = vmatpush1.msra.mxu0 %v30
    %309 = vmatprep.subr.mxu0 0.0
    %310 = vmatpush1.msra.mxu0 0.0
    %311 = vmatprep.subr.mxu0 0.0
    %312 = vmatpush1.msra.mxu0 0.0
    %313 = vmatprep.subr.mxu0 0.0
    %314 = vmatpush1.msra.mxu0 0.0
    %315 = vmatprep.subr.mxu0 0.0
    %316 = vmatpush1.msra.mxu0 0.0
    %317 = vmatprep.subr.mxu0 0.0
    %318 = vmatpush1.msra.mxu0 0.0
    %319 = vmatprep.subr.mxu0 0.0
    %320 = vmatpush1.msra.mxu0 0.0
    %321 = vmatprep.subr.mxu0 0.0
    %322 = vmatpush1.msra.mxu0 0.0
    %323 = vmatprep.subr.mxu0 0.0
    %324 = vmatpush1.msra.mxu0 0.0
    %325 = vmatprep.subr.mxu0 0.0
    %326 = vmatpush1.msra.mxu0 0.0
    %327 = vmatprep.subr.mxu0 0.0
    %328 = vmatpush1.msra.mxu0 0.0
    %329 = vmatprep.subr.mxu0 0.0
    %330 = vmatpush1.msra.mxu0 0.0
    %331 = vmatprep.subr.mxu0 0.0
    %332 = vmatpush1.msra.mxu0 0.0
    %333 = vmatprep.subr.mxu0 0.0
    %334 = vmatpush1.msra.mxu0 0.0
    %335 = vmatprep.subr.mxu0 0.0
    %336 = vmatpush1.msra.mxu0 0.0
    %337 = vmatprep.subr.mxu0 0.0
    %338 = vmatpush1.msra.mxu0 0.0
    %339 = vmatprep.subr.mxu0 0.0
    %340 = vmatpush1.msra.mxu0 0.0
    %341 = vmatprep.subr.mxu0 0.0
    %342 = vmatpush1.msra.mxu0 0.0
    %343 = vmatprep.subr.mxu0 0.0
    %344 = vmatpush1.msra.mxu0 0.0
    %345 = vmatprep.subr.mxu0 0.0
    %346 = vmatpush1.msra.mxu0 0.0
    %347 = vmatprep.subr.mxu0 0.0
    %348 = vmatpush1.msra.mxu0 0.0
    %349 = vmatprep.subr.mxu0 0.0
    %350 = vmatpush1.msra.mxu0 0.0
    %351 = vmatprep.subr.mxu0 0.0
    %352 = vmatpush1.msra.mxu0 0.0
    %353 = vmatprep.subr.mxu0 0.0
    %354 = vmatpush1.msra.mxu0 0.0
    %355 = vmatprep.subr.mxu0 0.0
    %356 = vmatpush1.msra.mxu0 0.0
    %357 = vmatprep.subr.mxu0 0.0
    %358 = vmatpush1.msra.mxu0 0.0
    %359 = vmatprep.subr.mxu0 0.0
    %360 = vmatpush1.msra.mxu0 0.0
    %361 = vmatprep.subr.mxu0 0.0
    %362 = vmatpush1.msra.mxu0 0.0
    %363 = vmatprep.subr.mxu0 0.0
    %364 = vmatpush1.msra.mxu0 0.0
    %365 = vmatprep.mubr.f32.mxu0 0.0
    %366 = vmatmul.mubr.f32.gmra.mrb[0].mxu0 %v299
    %v367 = vpop.f32.mrb[0].mxu0
    %v368 = vadd.f32 0.0, %v367
    %v369 = vpop.f32.mrb[0].mxu0
    %370 = vdwg.mxu0
    %v372 = vrot.slane %v368, 4
    %v374 = vadd.f32 %v143, %v372
    %v375 = vtanh.pop %v374
    %v377 = vrot.slane %v375, 4
    %v378 = vsel %vm138, %v377, 0
    %380 = vmatprep.subr.mxu0 0.0
    %381 = vmatpush1.msra.mxu0 %v27
    %382 = vmatprep.subr.mxu0 0.0
    %383 = vmatpush1.msra.mxu0 %v28
    %384 = vmatprep.subr.mxu0 0.0
    %385 = vmatpush1.msra.mxu0 %v29
    %386 = vmatprep.subr.mxu0 0.0
    %387 = vmatpush1.msra.mxu0 %v30
    %388 = vmatprep.subr.mxu0 0.0
    %389 = vmatpush1.msra.mxu0 0.0
    %390 = vmatprep.subr.mxu0 0.0
    %391 = vmatpush1.msra.mxu0 0.0
    %392 = vmatprep.subr.mxu0 0.0
    %393 = vmatpush1.msra.mxu0 0.0
    %394 = vmatprep.subr.mxu0 0.0
    %395 = vmatpush1.msra.mxu0 0.0
    %396 = vmatprep.subr.mxu0 0.0
    %397 = vmatpush1.msra.mxu0 0.0
    %398 = vmatprep.subr.mxu0 0.0
    %399 = vmatpush1.msra.mxu0 0.0
    %400 = vmatprep.subr.mxu0 0.0
    %401 = vmatpush1.msra.mxu0 0.0
    %402 = vmatprep.subr.mxu0 0.0
    %403 = vmatpush1.msra.mxu0 0.0
    %404 = vmatprep.subr.mxu0 0.0
    %405 = vmatpush1.msra.mxu0 0.0
    %406 = vmatprep.subr.mxu0 0.0
    %407 = vmatpush1.msra.mxu0 0.0
    %408 = vmatprep.subr.mxu0 0.0
    %409 = vmatpush1.msra.mxu0 0.0
    %410 = vmatprep.subr.mxu0 0.0
    %411 = vmatpush1.msra.mxu0 0.0
    %412 = vmatprep.subr.mxu0 0.0
    %413 = vmatpush1.msra.mxu0 0.0
    %414 = vmatprep.subr.mxu0 0.0
    %415 = vmatpush1.msra.mxu0 0.0
    %416 = vmatprep.subr.mxu0 0.0
    %417 = vmatpush1.msra.mxu0 0.0
    %418 = vmatprep.subr.mxu0 0.0
    %419 = vmatpush1.msra.mxu0 0.0
    %420 = vmatprep.subr.mxu0 0.0
    %421 = vmatpush1.msra.mxu0 0.0
    %422 = vmatprep.subr.mxu0 0.0
    %423 = vmatpush1.msra.mxu0 0.0
    %424 = vmatprep.subr.mxu0 0.0
    %425 = vmatpush1.msra.mxu0 0.0
    %426 = vmatprep.subr.mxu0 0.0
    %427 = vmatpush1.msra.mxu0 0.0
    %428 = vmatprep.subr.mxu0 0.0
    %429 = vmatpush1.msra.mxu0 0.0
    %430 = vmatprep.subr.mxu0 0.0
    %431 = vmatpush1.msra.mxu0 0.0
    %432 = vmatprep.subr.mxu0 0.0
    %433 = vmatpush1.msra.mxu0 0.0
    %434 = vmatprep.subr.mxu0 0.0
    %435 = vmatpush1.msra.mxu0 0.0
    %436 = vmatprep.subr.mxu0 0.0
    %437 = vmatpush1.msra.mxu0 0.0
    %438 = vmatprep.subr.mxu0 0.0
    %439 = vmatpush1.msra.mxu0 0.0
    %440 = vmatprep.subr.mxu0 0.0
    %441 = vmatpush1.msra.mxu0 0.0
    %442 = vmatprep.subr.mxu0 0.0
    %443 = vmatpush1.msra.mxu0 0.0
    %444 = vmatprep.mubr.f32.mxu0 0.0
    %445 = vmatmul.mubr.f32.gmra.mrb[0].mxu0 %v378
    %v446 = vpop.f32.mrb[0].mxu0
    %v447 = vadd.f32 0.0, %v446
    %v448 = vpop.f32.mrb[0].mxu0
    %449 = vdwg.mxu0
    %v451 = vrot.slane %v447, 2
    %v453 = vadd.f32 %v143, %v451
    %v454 = vtanh.pop %v453
    %vm455 = vcmask 1041408
    %v456 = vsel %vm455, %v218, %v296
    %vm457 = vcmask 1043456
    %v458 = vsel %vm457, %v456, %v375
    %vm459 = vcmask 1045504
    %v460 = vsel %vm459, %v458, %v454
    %461 = vst.msk [vmem:[#allocation2] sm:$0xff] %vm138, %v460
    %s462 = scalar_lea.vmem [#allocation2], 8
    %v463 = vld [vmem:[%s462] sm:$0xff]
    %v465 = vrot.slane %v454, 6
    %v466 = vsel %vm138, %v465, 0
    %468 = vmatprep.subr.mxu0 0.0
    %469 = vmatpush1.msra.mxu0 %v27
    %470 = vmatprep.subr.mxu0 0.0
    %471 = vmatpush1.msra.mxu0 %v28
    %472 = vmatprep.subr.mxu0 0.0
    %473 = vmatpush1.msra.mxu0 %v29
    %474 = vmatprep.subr.mxu0 0.0
    %475 = vmatpush1.msra.mxu0 %v30
    %476 = vmatprep.subr.mxu0 0.0
    %477 = vmatpush1.msra.mxu0 0.0
    %478 = vmatprep.subr.mxu0 0.0
    %479 = vmatpush1.msra.mxu0 0.0
    %480 = vmatprep.subr.mxu0 0.0
    %481 = vmatpush1.msra.mxu0 0.0
    %482 = vmatprep.subr.mxu0 0.0
    %483 = vmatpush1.msra.mxu0 0.0
    %484 = vmatprep.subr.mxu0 0.0
    %485 = vmatpush1.msra.mxu0 0.0
    %486 = vmatprep.subr.mxu0 0.0
    %487 = vmatpush1.msra.mxu0 0.0
    %488 = vmatprep.subr.mxu0 0.0
    %489 = vmatpush1.msra.mxu0 0.0
    %490 = vmatprep.subr.mxu0 0.0
    %491 = vmatpush1.msra.mxu0 0.0
    %492 = vmatprep.subr.mxu0 0.0
    %493 = vmatpush1.msra.mxu0 0.0
    %494 = vmatprep.subr.mxu0 0.0
    %495 = vmatpush1.msra.mxu0 0.0
    %496 = vmatprep.subr.mxu0 0.0
    %497 = vmatpush1.msra.mxu0 0.0
    %498 = vmatprep.subr.mxu0 0.0
    %499 = vmatpush1.msra.mxu0 0.0
    %500 = vmatprep.subr.mxu0 0.0
    %501 = vmatpush1.msra.mxu0 0.0
    %502 = vmatprep.subr.mxu0 0.0
    %503 = vmatpush1.msra.mxu0 0.0
    %504 = vmatprep.subr.mxu0 0.0
    %505 = vmatpush1.msra.mxu0 0.0
    %506 = vmatprep.subr.mxu0 0.0
    %507 = vmatpush1.msra.mxu0 0.0
    %508 = vmatprep.subr.mxu0 0.0
    %509 = vmatpush1.msra.mxu0 0.0
    %510 = vmatprep.subr.mxu0 0.0
    %511 = vmatpush1.msra.mxu0 0.0
    %512 = vmatprep.subr.mxu0 0.0
    %513 = vmatpush1.msra.mxu0 0.0
    %514 = vmatprep.subr.mxu0 0.0
    %515 = vmatpush1.msra.mxu0 0.0
    %516 = vmatprep.subr.mxu0 0.0
    %517 = vmatpush1.msra.mxu0 0.0
    %518 = vmatprep.subr.mxu0 0.0
    %519 = vmatpush1.msra.mxu0 0.0
    %520 = vmatprep.subr.mxu0 0.0
    %521 = vmatpush1.msra.mxu0 0.0
    %522 = vmatprep.subr.mxu0 0.0
    %523 = vmatpush1.msra.mxu0 0.0
    %524 = vmatprep.subr.mxu0 0.0
    %525 = vmatpush1.msra.mxu0 0.0
    %526 = vmatprep.subr.mxu0 0.0
    %527 = vmatpush1.msra.mxu0 0.0
    %528 = vmatprep.subr.mxu0 0.0
    %529 = vmatpush1.msra.mxu0 0.0
    %530 = vmatprep.subr.mxu0 0.0
    %531 = vmatpush1.msra.mxu0 0.0
    %532 = vmatprep.mubr.f32.mxu0 0.0
    %533 = vmatmul.mubr.f32.gmra.mrb[0].mxu0 %v466
    %v534 = vpop.f32.mrb[0].mxu0
    %v535 = vadd.f32 0.0, %v534
    %v536 = vpop.f32.mrb[0].mxu0
    %537 = vdwg.mxu0
    %v538 = vadd.f32 %v463, %v535
    %v539 = vtanh.pop %v538
    %v541 = vsel %vm138, %v539, 0
    %543 = vmatprep.subr.mxu0 0.0
    %544 = vmatpush1.msra.mxu0 %v27
    %545 = vmatprep.subr.mxu0 0.0
    %546 = vmatpush1.msra.mxu0 %v28
    %547 = vmatprep.subr.mxu0 0.0
    %548 = vmatpush1.msra.mxu0 %v29
    %549 = vmatprep.subr.mxu0 0.0
    %550 = vmatpush1.msra.mxu0 %v30
    %551 = vmatprep.subr.mxu0 0.0
    %552 = vmatpush1.msra.mxu0 0.0
    %553 = vmatprep.subr.mxu0 0.0
    %554 = vmatpush1.msra.mxu0 0.0
    %555 = vmatprep.subr.mxu0 0.0
    %556 = vmatpush1.msra.mxu0 0.0
    %557 = vmatprep.subr.mxu0 0.0
    %558 = vmatpush1.msra.mxu0 0.0
    %559 = vmatprep.subr.mxu0 0.0
    %560 = vmatpush1.msra.mxu0 0.0
    %561 = vmatprep.subr.mxu0 0.0
    %562 = vmatpush1.msra.mxu0 0.0
    %563 = vmatprep.subr.mxu0 0.0
    %564 = vmatpush1.msra.mxu0 0.0
    %565 = vmatprep.subr.mxu0 0.0
    %566 = vmatpush1.msra.mxu0 0.0
    %567 = vmatprep.subr.mxu0 0.0
    %568 = vmatpush1.msra.mxu0 0.0
    %569 = vmatprep.subr.mxu0 0.0
    %570 = vmatpush1.msra.mxu0 0.0
    %571 = vmatprep.subr.mxu0 0.0
    %572 = vmatpush1.msra.mxu0 0.0
    %573 = vmatprep.subr.mxu0 0.0
    %574 = vmatpush1.msra.mxu0 0.0
    %575 = vmatprep.subr.mxu0 0.0
    %576 = vmatpush1.msra.mxu0 0.0
    %577 = vmatprep.subr.mxu0 0.0
    %578 = vmatpush1.msra.mxu0 0.0
    %579 = vmatprep.subr.mxu0 0.0
    %580 = vmatpush1.msra.mxu0 0.0
    %581 = vmatprep.subr.mxu0 0.0
    %582 = vmatpush1.msra.mxu0 0.0
    %583 = vmatprep.subr.mxu0 0.0
    %584 = vmatpush1.msra.mxu0 0.0
    %585 = vmatprep.subr.mxu0 0.0
    %586 = vmatpush1.msra.mxu0 0.0
    %587 = vmatprep.subr.mxu0 0.0
    %588 = vmatpush1.msra.mxu0 0.0
    %589 = vmatprep.subr.mxu0 0.0
    %590 = vmatpush1.msra.mxu0 0.0
    %591 = vmatprep.subr.mxu0 0.0
    %592 = vmatpush1.msra.mxu0 0.0
    %593 = vmatprep.subr.mxu0 0.0
    %594 = vmatpush1.msra.mxu0 0.0
    %595 = vmatprep.subr.mxu0 0.0
    %596 = vmatpush1.msra.mxu0 0.0
    %597 = vmatprep.subr.mxu0 0.0
    %598 = vmatpush1.msra.mxu0 0.0
    %599 = vmatprep.subr.mxu0 0.0
    %600 = vmatpush1.msra.mxu0 0.0
    %601 = vmatprep.subr.mxu0 0.0
    %602 = vmatpush1.msra.mxu0 0.0
    %603 = vmatprep.subr.mxu0 0.0
    %604 = vmatpush1.msra.mxu0 0.0
    %605 = vmatprep.subr.mxu0 0.0
    %606 = vmatpush1.msra.mxu0 0.0
    %607 = vmatprep.mubr.f32.mxu0 0.0
    %608 = vmatmul.mubr.f32.gmra.mrb[0].mxu0 %v541
    %v609 = vpop.f32.mrb[0].mxu0
    %v610 = vadd.f32 0.0, %v609
    %v611 = vpop.f32.mrb[0].mxu0
    %612 = vdwg.mxu0
    %v614 = vrot.slane %v610, 6
    %v616 = vadd.f32 %v463, %v614
    %v617 = vtanh.pop %v616
    %v619 = vrot.slane %v617, 2
    %v620 = vsel %vm138, %v619, 0
    %622 = vmatprep.subr.mxu0 0.0
    %623 = vmatpush1.msra.mxu0 %v27
    %624 = vmatprep.subr.mxu0 0.0
    %625 = vmatpush1.msra.mxu0 %v28
    %626 = vmatprep.subr.mxu0 0.0
    %627 = vmatpush1.msra.mxu0 %v29
    %628 = vmatprep.subr.mxu0 0.0
    %629 = vmatpush1.msra.mxu0 %v30
    %630 = vmatprep.subr.mxu0 0.0
    %631 = vmatpush1.msra.mxu0 0.0
    %632 = vmatprep.subr.mxu0 0.0
    %633 = vmatpush1.msra.mxu0 0.0
    %634 = vmatprep.subr.mxu0 0.0
    %635 = vmatpush1.msra.mxu0 0.0
    %636 = vmatprep.subr.mxu0 0.0
    %637 = vmatpush1.msra.mxu0 0.0
    %638 = vmatprep.subr.mxu0 0.0
    %639 = vmatpush1.msra.mxu0 0.0
    %640 = vmatprep.subr.mxu0 0.0
    %641 = vmatpush1.msra.mxu0 0.0
    %642 = vmatprep.subr.mxu0 0.0
    %643 = vmatpush1.msra.mxu0 0.0
    %644 = vmatprep.subr.mxu0 0.0
    %645 = vmatpush1.msra.mxu0 0.0
    %646 = vmatprep.subr.mxu0 0.0
    %647 = vmatpush1.msra.mxu0 0.0
    %648 = vmatprep.subr.mxu0 0.0
    %649 = vmatpush1.msra.mxu0 0.0
    %650 = vmatprep.subr.mxu0 0.0
    %651 = vmatpush1.msra.mxu0 0.0
    %652 = vmatprep.subr.mxu0 0.0
    %653 = vmatpush1.msra.mxu0 0.0
    %654 = vmatprep.subr.mxu0 0.0
    %655 = vmatpush1.msra.mxu0 0.0
    %656 = vmatprep.subr.mxu0 0.0
    %657 = vmatpush1.msra.mxu0 0.0
    %658 = vmatprep.subr.mxu0 0.0
    %659 = vmatpush1.msra.mxu0 0.0
    %660 = vmatprep.subr.mxu0 0.0
    %661 = vmatpush1.msra.mxu0 0.0
    %662 = vmatprep.subr.mxu0 0.0
    %663 = vmatpush1.msra.mxu0 0.0
    %664 = vmatprep.subr.mxu0 0.0
    %665 = vmatpush1.msra.mxu0 0.0
    %666 = vmatprep.subr.mxu0 0.0
    %667 = vmatpush1.msra.mxu0 0.0
    %668 = vmatprep.subr.mxu0 0.0
    %669 = vmatpush1.msra.mxu0 0.0
    %670 = vmatprep.subr.mxu0 0.0
    %671 = vmatpush1.msra.mxu0 0.0
    %672 = vmatprep.subr.mxu0 0.0
    %673 = vmatpush1.msra.mxu0 0.0
    %674 = vmatprep.subr.mxu0 0.0
    %675 = vmatpush1.msra.mxu0 0.0
    %676 = vmatprep.subr.mxu0 0.0
    %677 = vmatpush1.msra.mxu0 0.0
    %678 = vmatprep.subr.mxu0 0.0
    %679 = vmatpush1.msra.mxu0 0.0
    %680 = vmatprep.subr.mxu0 0.0
    %681 = vmatpush1.msra.mxu0 0.0
    %682 = vmatprep.subr.mxu0 0.0
    %683 = vmatpush1.msra.mxu0 0.0
    %684 = vmatprep.subr.mxu0 0.0
    %685 = vmatpush1.msra.mxu0 0.0
    %686 = vmatprep.mubr.f32.mxu0 0.0
    %687 = vmatmul.mubr.f32.gmra.mrb[0].mxu0 %v620
    %v688 = vpop.f32.mrb[0].mxu0
    %v689 = vadd.f32 0.0, %v688
    %v690 = vpop.f32.mrb[0].mxu0
    %691 = vdwg.mxu0
    %v693 = vrot.slane %v689, 4
    %v695 = vadd.f32 %v463, %v693
    %v696 = vtanh.pop %v695
    %v698 = vrot.slane %v696, 4
    %v699 = vsel %vm138, %v698, 0
    %701 = vmatprep.subr.mxu0 0.0
    %702 = vmatpush1.msra.mxu0 %v27
    %703 = vmatprep.subr.mxu0 0.0
    %704 = vmatpush1.msra.mxu0 %v28
    %705 = vmatprep.subr.mxu0 0.0
    %706 = vmatpush1.msra.mxu0 %v29
    %707 = vmatprep.subr.mxu0 0.0
    %708 = vmatpush1.msra.mxu0 %v30
    %709 = vmatprep.subr.mxu0 0.0
    %710 = vmatpush1.msra.mxu0 0.0
    %711 = vmatprep.subr.mxu0 0.0
    %712 = vmatpush1.msra.mxu0 0.0
    %713 = vmatprep.subr.mxu0 0.0
    %714 = vmatpush1.msra.mxu0 0.0
    %715 = vmatprep.subr.mxu0 0.0
    %716 = vmatpush1.msra.mxu0 0.0
    %717 = vmatprep.subr.mxu0 0.0
    %718 = vmatpush1.msra.mxu0 0.0
    %719 = vmatprep.subr.mxu0 0.0
    %720 = vmatpush1.msra.mxu0 0.0
    %721 = vmatprep.subr.mxu0 0.0
    %722 = vmatpush1.msra.mxu0 0.0
    %723 = vmatprep.subr.mxu0 0.0
    %724 = vmatpush1.msra.mxu0 0.0
    %725 = vmatprep.subr.mxu0 0.0
    %726 = vmatpush1.msra.mxu0 0.0
    %727 = vmatprep.subr.mxu0 0.0
    %728 = vmatpush1.msra.mxu0 0.0
    %729 = vmatprep.subr.mxu0 0.0
    %730 = vmatpush1.msra.mxu0 0.0
    %731 = vmatprep.subr.mxu0 0.0
    %732 = vmatpush1.msra.mxu0 0.0
    %733 = vmatprep.subr.mxu0 0.0
    %734 = vmatpush1.msra.mxu0 0.0
    %735 = vmatprep.subr.mxu0 0.0
    %736 = vmatpush1.msra.mxu0 0.0
    %737 = vmatprep.subr.mxu0 0.0
    %738 = vmatpush1.msra.mxu0 0.0
    %739 = vmatprep.subr.mxu0 0.0
    %740 = vmatpush1.msra.mxu0 0.0
    %741 = vmatprep.subr.mxu0 0.0
    %742 = vmatpush1.msra.mxu0 0.0
    %743 = vmatprep.subr.mxu0 0.0
    %744 = vmatpush1.msra.mxu0 0.0
    %745 = vmatprep.subr.mxu0 0.0
    %746 = vmatpush1.msra.mxu0 0.0
    %747 = vmatprep.subr.mxu0 0.0
    %748 = vmatpush1.msra.mxu0 0.0
    %749 = vmatprep.subr.mxu0 0.0
    %750 = vmatpush1.msra.mxu0 0.0
    %751 = vmatprep.subr.mxu0 0.0
    %752 = vmatpush1.msra.mxu0 0.0
    %753 = vmatprep.subr.mxu0 0.0
    %754 = vmatpush1.msra.mxu0 0.0
    %755 = vmatprep.subr.mxu0 0.0
    %756 = vmatpush1.msra.mxu0 0.0
    %757 = vmatprep.subr.mxu0 0.0
    %758 = vmatpush1.msra.mxu0 0.0
    %759 = vmatprep.subr.mxu0 0.0
    %760 = vmatpush1.msra.mxu0 0.0
    %761 = vmatprep.subr.mxu0 0.0
    %762 = vmatpush1.msra.mxu0 0.0
    %763 = vmatprep.subr.mxu0 0.0
    %764 = vmatpush1.msra.mxu0 0.0
    %765 = vmatprep.mubr.f32.mxu0 0.0
    %766 = vmatmul.mubr.f32.gmra.mrb[0].mxu0 %v699
    %v767 = vpop.f32.mrb[0].mxu0
    %v768 = vadd.f32 0.0, %v767
    %v769 = vpop.f32.mrb[0].mxu0
    %770 = vdwg.mxu0
    %v772 = vrot.slane %v768, 2
    %v774 = vadd.f32 %v463, %v772
    %v775 = vtanh.pop %v774
    %v776 = vsel %vm455, %v539, %v617
    %v777 = vsel %vm457, %v776, %v696
    %v778 = vsel %vm459, %v777, %v775
    %779 = vst.msk [vmem:[%s462] sm:$0xff] %vm138, %v778
    %s780 = scalar_lea.vmem [#allocation2], 16
    %v781 = vld [vmem:[%s780] sm:$0xff]
    %v783 = vrot.slane %v775, 6
    %v784 = vsel %vm138, %v783, 0
    %786 = vmatprep.subr.mxu0 0.0
    %787 = vmatpush1.msra.mxu0 %v27
    %788 = vmatprep.subr.mxu0 0.0
    %789 = vmatpush1.msra.mxu0 %v28
    %790 = vmatprep.subr.mxu0 0.0
    %791 = vmatpush1.msra.mxu0 %v29
    %792 = vmatprep.subr.mxu0 0.0
    %793 = vmatpush1.msra.mxu0 %v30
    %794 = vmatprep.subr.mxu0 0.0
    %795 = vmatpush1.msra.mxu0 0.0
    %796 = vmatprep.subr.mxu0 0.0
    %797 = vmatpush1.msra.mxu0 0.0
    %798 = vmatprep.subr.mxu0 0.0
    %799 = vmatpush1.msra.mxu0 0.0
    %800 = vmatprep.subr.mxu0 0.0
    %801 = vmatpush1.msra.mxu0 0.0
    %802 = vmatprep.subr.mxu0 0.0
    %803 = vmatpush1.msra.mxu0 0.0
    %804 = vmatprep.subr.mxu0 0.0
    %805 = vmatpush1.msra.mxu0 0.0
    %806 = vmatprep.subr.mxu0 0.0
    %807 = vmatpush1.msra.mxu0 0.0
    %808 = vmatprep.subr.mxu0 0.0
    %809 = vmatpush1.msra.mxu0 0.0
    %810 = vmatprep.subr.mxu0 0.0
    %811 = vmatpush1.msra.mxu0 0.0
    %812 = vmatprep.subr.mxu0 0.0
    %813 = vmatpush1.msra.mxu0 0.0
    %814 = vmatprep.subr.mxu0 0.0
    %815 = vmatpush1.msra.mxu0 0.0
    %816 = vmatprep.subr.mxu0 0.0
    %817 = vmatpush1.msra.mxu0 0.0
    %818 = vmatprep.subr.mxu0 0.0
    %819 = vmatpush1.msra.mxu0 0.0
    %820 = vmatprep.subr.mxu0 0.0
    %821 = vmatpush1.msra.mxu0 0.0
    %822 = vmatprep.subr.mxu0 0.0
    %823 = vmatpush1.msra.mxu0 0.0
    %824 = vmatprep.subr.mxu0 0.0
    %825 = vmatpush1.msra.mxu0 0.0
    %826 = vmatprep.subr.mxu0 0.0
    %827 = vmatpush1.msra.mxu0 0.0
    %828 = vmatprep.subr.mxu0 0.0
    %829 = vmatpush1.msra.mxu0 0.0
    %830 = vmatprep.subr.mxu0 0.0
    %831 = vmatpush1.msra.mxu0 0.0
    %832 = vmatprep.subr.mxu0 0.0
    %833 = vmatpush1.msra.mxu0 0.0
    %834 = vmatprep.subr.mxu0 0.0
    %835 = vmatpush1.msra.mxu0 0.0
    %836 = vmatprep.subr.mxu0 0.0
    %837 = vmatpush1.msra.mxu0 0.0
    %838 = vmatprep.subr.mxu0 0.0
    %839 = vmatpush1.msra.mxu0 0.0
    %840 = vmatprep.subr.mxu0 0.0
    %841 = vmatpush1.msra.mxu0 0.0
    %842 = vmatprep.subr.mxu0 0.0
    %843 = vmatpush1.msra.mxu0 0.0
    %844 = vmatprep.subr.mxu0 0.0
    %845 = vmatpush1.msra.mxu0 0.0
    %846 = vmatprep.subr.mxu0 0.0
    %847 = vmatpush1.msra.mxu0 0.0
    %848 = vmatprep.subr.mxu0 0.0
    %849 = vmatpush1.msra.mxu0 0.0
    %850 = vmatprep.mubr.f32.mxu0 0.0
    %851 = vmatmul.mubr.f32.gmra.mrb[0].mxu0 %v784
    %v852 = vpop.f32.mrb[0].mxu0
    %v853 = vadd.f32 0.0, %v852
    %v854 = vpop.f32.mrb[0].mxu0
    %855 = vdwg.mxu0
    %v856 = vadd.f32 %v781, %v853
    %v857 = vtanh.pop %v856
    %v859 = vsel %vm138, %v857, 0
    %861 = vmatprep.subr.mxu0 0.0
    %862 = vmatpush1.msra.mxu0 %v27
    %863 = vmatprep.subr.mxu0 0.0
    %864 = vmatpush1.msra.mxu0 %v28
    %865 = vmatprep.subr.mxu0 0.0
    %866 = vmatpush1.msra.mxu0 %v29
    %867 = vmatprep.subr.mxu0 0.0
    %868 = vmatpush1.msra.mxu0 %v30
    %869 = vmatprep.subr.mxu0 0.0
    %870 = vmatpush1.msra.mxu0 0.0
    %871 = vmatprep.subr.mxu0 0.0
    %872 = vmatpush1.msra.mxu0 0.0
    %873 = vmatprep.subr.mxu0 0.0
    %874 = vmatpush1.msra.mxu0 0.0
    %875 = vmatprep.subr.mxu0 0.0
    %876 = vmatpush1.msra.mxu0 0.0
    %877 = vmatprep.subr.mxu0 0.0
    %878 = vmatpush1.msra.mxu0 0.0
    %879 = vmatprep.subr.mxu0 0.0
    %880 = vmatpush1.msra.mxu0 0.0
    %881 = vmatprep.subr.mxu0 0.0
    %882 = vmatpush1.msra.mxu0 0.0
    %883 = vmatprep.subr.mxu0 0.0
    %884 = vmatpush1.msra.mxu0 0.0
    %885 = vmatprep.subr.mxu0 0.0
    %886 = vmatpush1.msra.mxu0 0.0
    %887 = vmatprep.subr.mxu0 0.0
    %888 = vmatpush1.msra.mxu0 0.0
    %889 = vmatprep.subr.mxu0 0.0
    %890 = vmatpush1.msra.mxu0 0.0
    %891 = vmatprep.subr.mxu0 0.0
    %892 = vmatpush1.msra.mxu0 0.0
    %893 = vmatprep.subr.mxu0 0.0
    %894 = vmatpush1.msra.mxu0 0.0
    %895 = vmatprep.subr.mxu0 0.0
    %896 = vmatpush1.msra.mxu0 0.0
    %897 = vmatprep.subr.mxu0 0.0
    %898 = vmatpush1.msra.mxu0 0.0
    %899 = vmatprep.subr.mxu0 0.0
    %900 = vmatpush1.msra.mxu0 0.0
    %901 = vmatprep.subr.mxu0 0.0
    %902 = vmatpush1.msra.mxu0 0.0
    %903 = vmatprep.subr.mxu0 0.0
    %904 = vmatpush1.msra.mxu0 0.0
    %905 = vmatprep.subr.mxu0 0.0
    %906 = vmatpush1.msra.mxu0 0.0
    %907 = vmatprep.subr.mxu0 0.0
    %908 = vmatpush1.msra.mxu0 0.0
    %909 = vmatprep.subr.mxu0 0.0
    %910 = vmatpush1.msra.mxu0 0.0
    %911 = vmatprep.subr.mxu0 0.0
    %912 = vmatpush1.msra.mxu0 0.0
    %913 = vmatprep.subr.mxu0 0.0
    %914 = vmatpush1.msra.mxu0 0.0
    %915 = vmatprep.subr.mxu0 0.0
    %916 = vmatpush1.msra.mxu0 0.0
    %917 = vmatprep.subr.mxu0 0.0
    %918 = vmatpush1.msra.mxu0 0.0
    %919 = vmatprep.subr.mxu0 0.0
    %920 = vmatpush1.msra.mxu0 0.0
    %921 = vmatprep.subr.mxu0 0.0
    %922 = vmatpush1.msra.mxu0 0.0
    %923 = vmatprep.subr.mxu0 0.0
    %924 = vmatpush1.msra.mxu0 0.0
    %925 = vmatprep.mubr.f32.mxu0 0.0
    %926 = vmatmul.mubr.f32.gmra.mrb[0].mxu0 %v859
    %v927 = vpop.f32.mrb[0].mxu0
    %v928 = vadd.f32 0.0, %v927
    %v929 = vpop.f32.mrb[0].mxu0
    %930 = vdwg.mxu0
    %v932 = vrot.slane %v928, 6
    %v934 = vadd.f32 %v781, %v932
    %v935 = vtanh.pop %v934
    %v937 = vrot.slane %v935, 2
    %v938 = vsel %vm138, %v937, 0
    %940 = vmatprep.subr.mxu0 0.0
    %941 = vmatpush1.msra.mxu0 %v27
    %942 = vmatprep.subr.mxu0 0.0
    %943 = vmatpush1.msra.mxu0 %v28
    %944 = vmatprep.subr.mxu0 0.0
    %945 = vmatpush1.msra.mxu0 %v29
    %946 = vmatprep.subr.mxu0 0.0
    %947 = vmatpush1.msra.mxu0 %v30
    %948 = vmatprep.subr.mxu0 0.0
    %949 = vmatpush1.msra.mxu0 0.0
    %950 = vmatprep.subr.mxu0 0.0
    %951 = vmatpush1.msra.mxu0 0.0
    %952 = vmatprep.subr.mxu0 0.0
    %953 = vmatpush1.msra.mxu0 0.0
    %954 = vmatprep.subr.mxu0 0.0
    %955 = vmatpush1.msra.mxu0 0.0
    %956 = vmatprep.subr.mxu0 0.0
    %957 = vmatpush1.msra.mxu0 0.0
    %958 = vmatprep.subr.mxu0 0.0
    %959 = vmatpush1.msra.mxu0 0.0
    %960 = vmatprep.subr.mxu0 0.0
    %961 = vmatpush1.msra.mxu0 0.0
    %962 = vmatprep.subr.mxu0 0.0
    %963 = vmatpush1.msra.mxu0 0.0
    %964 = vmatprep.subr.mxu0 0.0
    %965 = vmatpush1.msra.mxu0 0.0
    %966 = vmatprep.subr.mxu0 0.0
    %967 = vmatpush1.msra.mxu0 0.0
    %968 = vmatprep.subr.mxu0 0.0
    %969 = vmatpush1.msra.mxu0 0.0
    %970 = vmatprep.subr.mxu0 0.0
    %971 = vmatpush1.msra.mxu0 0.0
    %972 = vmatprep.subr.mxu0 0.0
    %973 = vmatpush1.msra.mxu0 0.0
    %974 = vmatprep.subr.mxu0 0.0
    %975 = vmatpush1.msra.mxu0 0.0
    %976 = vmatprep.subr.mxu0 0.0
    %977 = vmatpush1.msra.mxu0 0.0
    %978 = vmatprep.subr.mxu0 0.0
    %979 = vmatpush1.msra.mxu0 0.0
    %980 = vmatprep.subr.mxu0 0.0
    %981 = vmatpush1.msra.mxu0 0.0
    %982 = vmatprep.subr.mxu0 0.0
    %983 = vmatpush1.msra.mxu0 0.0
    %984 = vmatprep.subr.mxu0 0.0
    %985 = vmatpush1.msra.mxu0 0.0
    %986 = vmatprep.subr.mxu0 0.0
    %987 = vmatpush1.msra.mxu0 0.0
    %988 = vmatprep.subr.mxu0 0.0
    %989 = vmatpush1.msra.mxu0 0.0
    %990 = vmatprep.subr.mxu0 0.0
    %991 = vmatpush1.msra.mxu0 0.0
    %992 = vmatprep.subr.mxu0 0.0
    %993 = vmatpush1.msra.mxu0 0.0
    %994 = vmatprep.subr.mxu0 0.0
    %995 = vmatpush1.msra.mxu0 0.0
    %996 = vmatprep.subr.mxu0 0.0
    %997 = vmatpush1.msra.mxu0 0.0
    %998 = vmatprep.subr.mxu0 0.0
    %999 = vmatpush1.msra.mxu0 0.0
    %1000 = vmatprep.subr.mxu0 0.0
    %1001 = vmatpush1.msra.mxu0 0.0
    %1002 = vmatprep.subr.mxu0 0.0
    %1003 = vmatpush1.msra.mxu0 0.0
    %1004 = vmatprep.mubr.f32.mxu0 0.0
    %1005 = vmatmul.mubr.f32.gmra.mrb[0].mxu0 %v938
    %v1006 = vpop.f32.mrb[0].mxu0
    %v1007 = vadd.f32 0.0, %v1006
    %v1008 = vpop.f32.mrb[0].mxu0
    %1009 = vdwg.mxu0
    %v1011 = vrot.slane %v1007, 4
    %v1013 = vadd.f32 %v781, %v1011
    %v1014 = vtanh.pop %v1013
    %v1016 = vrot.slane %v1014, 4
    %v1017 = vsel %vm138, %v1016, 0
    %1019 = vmatprep.subr.mxu0 0.0
    %1020 = vmatpush1.msra.mxu0 %v27
    %1021 = vmatprep.subr.mxu0 0.0
    %1022 = vmatpush1.msra.mxu0 %v28
    %1023 = vmatprep.subr.mxu0 0.0
    %1024 = vmatpush1.msra.mxu0 %v29
    %1025 = vmatprep.subr.mxu0 0.0
    %1026 = vmatpush1.msra.mxu0 %v30
    %1027 = vmatprep.subr.mxu0 0.0
    %1028 = vmatpush1.msra.mxu0 0.0
    %1029 = vmatprep.subr.mxu0 0.0
    %1030 = vmatpush1.msra.mxu0 0.0
    %1031 = vmatprep.subr.mxu0 0.0
    %1032 = vmatpush1.msra.mxu0 0.0
    %1033 = vmatprep.subr.mxu0 0.0
    %1034 = vmatpush1.msra.mxu0 0.0
    %1035 = vmatprep.subr.mxu0 0.0
    %1036 = vmatpush1.msra.mxu0 0.0
    %1037 = vmatprep.subr.mxu0 0.0
    %1038 = vmatpush1.msra.mxu0 0.0
    %1039 = vmatprep.subr.mxu0 0.0
    %1040 = vmatpush1.msra.mxu0 0.0
    %1041 = vmatprep.subr.mxu0 0.0
    %1042 = vmatpush1.msra.mxu0 0.0
    %1043 = vmatprep.subr.mxu0 0.0
    %1044 = vmatpush1.msra.mxu0 0.0
    %1045 = vmatprep.subr.mxu0 0.0
    %1046 = vmatpush1.msra.mxu0 0.0
    %1047 = vmatprep.subr.mxu0 0.0
    %1048 = vmatpush1.msra.mxu0 0.0
    %1049 = vmatprep.subr.mxu0 0.0
    %1050 = vmatpush1.msra.mxu0 0.0
    %1051 = vmatprep.subr.mxu0 0.0
    %1052 = vmatpush1.msra.mxu0 0.0
    %1053 = vmatprep.subr.mxu0 0.0
    %1054 = vmatpush1.msra.mxu0 0.0
    %1055 = vmatprep.subr.mxu0 0.0
    %1056 = vmatpush1.msra.mxu0 0.0
    %1057 = vmatprep.subr.mxu0 0.0
    %1058 = vmatpush1.msra.mxu0 0.0
    %1059 = vmatprep.subr.mxu0 0.0
    %1060 = vmatpush1.msra.mxu0 0.0
    %1061 = vmatprep.subr.mxu0 0.0
    %1062 = vmatpush1.msra.mxu0 0.0
    %1063 = vmatprep.subr.mxu0 0.0
    %1064 = vmatpush1.msra.mxu0 0.0
    %1065 = vmatprep.subr.mxu0 0.0
    %1066 = vmatpush1.msra.mxu0 0.0
    %1067 = vmatprep.subr.mxu0 0.0
    %1068 = vmatpush1.msra.mxu0 0.0
    %1069 = vmatprep.subr.mxu0 0.0
    %1070 = vmatpush1.msra.mxu0 0.0
    %1071 = vmatprep.subr.mxu0 0.0
    %1072 = vmatpush1.msra.mxu0 0.0
    %1073 = vmatprep.subr.mxu0 0.0
    %1074 = vmatpush1.msra.mxu0 0.0
    %1075 = vmatprep.subr.mxu0 0.0
    %1076 = vmatpush1.msra.mxu0 0.0
    %1077 = vmatprep.subr.mxu0 0.0
    %1078 = vmatpush1.msra.mxu0 0.0
    %1079 = vmatprep.subr.mxu0 0.0
    %1080 = vmatpush1.msra.mxu0 0.0
    %1081 = vmatprep.subr.mxu0 0.0
    %1082 = vmatpush1.msra.mxu0 0.0
    %1083 = vmatprep.mubr.f32.mxu0 0.0
    %1084 = vmatmul.mubr.f32.gmra.mrb[0].mxu0 %v1017
    %v1085 = vpop.f32.mrb[0].mxu0
    %v1086 = vadd.f32 0.0, %v1085
    %v1087 = vpop.f32.mrb[0].mxu0
    %1088 = vdwg.mxu0
    %v1090 = vrot.slane %v1086, 2
    %v1092 = vadd.f32 %v781, %v1090
    %v1093 = vtanh.pop %v1092
    %v1094 = vsel %vm455, %v857, %v935
    %v1095 = vsel %vm457, %v1094, %v1014
    %v1096 = vsel %vm459, %v1095, %v1093
    %1097 = vst.msk [vmem:[%s780] sm:$0xff] %vm138, %v1096
    %s1098 = scalar_lea.vmem [#allocation2], 24
    %v1099 = vld [vmem:[%s1098] sm:$0xff]
    %v1101 = vrot.slane %v1093, 6
    %v1102 = vsel %vm138, %v1101, 0
    %1104 = vmatprep.subr.mxu0 0.0
    %1105 = vmatpush1.msra.mxu0 %v27
    %1106 = vmatprep.subr.mxu0 0.0
    %1107 = vmatpush1.msra.mxu0 %v28
    %1108 = vmatprep.subr.mxu0 0.0
    %1109 = vmatpush1.msra.mxu0 %v29
    %1110 = vmatprep.subr.mxu0 0.0
    %1111 = vmatpush1.msra.mxu0 %v30
    %1112 = vmatprep.subr.mxu0 0.0
    %1113 = vmatpush1.msra.mxu0 0.0
    %1114 = vmatprep.subr.mxu0 0.0
    %1115 = vmatpush1.msra.mxu0 0.0
    %1116 = vmatprep.subr.mxu0 0.0
    %1117 = vmatpush1.msra.mxu0 0.0
    %1118 = vmatprep.subr.mxu0 0.0
    %1119 = vmatpush1.msra.mxu0 0.0
    %1120 = vmatprep.subr.mxu0 0.0
    %1121 = vmatpush1.msra.mxu0 0.0
    %1122 = vmatprep.subr.mxu0 0.0
    %1123 = vmatpush1.msra.mxu0 0.0
    %1124 = vmatprep.subr.mxu0 0.0
    %1125 = vmatpush1.msra.mxu0 0.0
    %1126 = vmatprep.subr.mxu0 0.0
    %1127 = vmatpush1.msra.mxu0 0.0
    %1128 = vmatprep.subr.mxu0 0.0
    %1129 = vmatpush1.msra.mxu0 0.0
    %1130 = vmatprep.subr.mxu0 0.0
    %1131 = vmatpush1.msra.mxu0 0.0
    %1132 = vmatprep.subr.mxu0 0.0
    %1133 = vmatpush1.msra.mxu0 0.0
    %1134 = vmatprep.subr.mxu0 0.0
    %1135 = vmatpush1.msra.mxu0 0.0
    %1136 = vmatprep.subr.mxu0 0.0
    %1137 = vmatpush1.msra.mxu0 0.0
    %1138 = vmatprep.subr.mxu0 0.0
    %1139 = vmatpush1.msra.mxu0 0.0
    %1140 = vmatprep.subr.mxu0 0.0
    %1141 = vmatpush1.msra.mxu0 0.0
    %1142 = vmatprep.subr.mxu0 0.0
    %1143 = vmatpush1.msra.mxu0 0.0
    %1144 = vmatprep.subr.mxu0 0.0
    %1145 = vmatpush1.msra.mxu0 0.0
    %1146 = vmatprep.subr.mxu0 0.0
    %1147 = vmatpush1.msra.mxu0 0.0
    %1148 = vmatprep.subr.mxu0 0.0
    %1149 = vmatpush1.msra.mxu0 0.0
    %1150 = vmatprep.subr.mxu0 0.0
    %1151 = vmatpush1.msra.mxu0 0.0
    %1152 = vmatprep.subr.mxu0 0.0
    %1153 = vmatpush1.msra.mxu0 0.0
    %1154 = vmatprep.subr.mxu0 0.0
    %1155 = vmatpush1.msra.mxu0 0.0
    %1156 = vmatprep.subr.mxu0 0.0
    %1157 = vmatpush1.msra.mxu0 0.0
    %1158 = vmatprep.subr.mxu0 0.0
    %1159 = vmatpush1.msra.mxu0 0.0
    %1160 = vmatprep.subr.mxu0 0.0
    %1161 = vmatpush1.msra.mxu0 0.0
    %1162 = vmatprep.subr.mxu0 0.0
    %1163 = vmatpush1.msra.mxu0 0.0
    %1164 = vmatprep.subr.mxu0 0.0
    %1165 = vmatpush1.msra.mxu0 0.0
    %1166 = vmatprep.subr.mxu0 0.0
    %1167 = vmatpush1.msra.mxu0 0.0
    %1168 = vmatprep.mubr.f32.mxu0 0.0
    %1169 = vmatmul.mubr.f32.gmra.mrb[0].mxu0 %v1102
    %v1170 = vpop.f32.mrb[0].mxu0
    %v1171 = vadd.f32 0.0, %v1170
    %v1172 = vpop.f32.mrb[0].mxu0
    %1173 = vdwg.mxu0
    %v1174 = vadd.f32 %v1099, %v1171
    %v1175 = vtanh.pop %v1174
    %v1177 = vsel %vm138, %v1175, 0
    %1179 = vmatprep.subr.mxu0 0.0
    %1180 = vmatpush1.msra.mxu0 %v27
    %1181 = vmatprep.subr.mxu0 0.0
    %1182 = vmatpush1.msra.mxu0 %v28
    %1183 = vmatprep.subr.mxu0 0.0
    %1184 = vmatpush1.msra.mxu0 %v29
    %1185 = vmatprep.subr.mxu0 0.0
    %1186 = vmatpush1.msra.mxu0 %v30
    %1187 = vmatprep.subr.mxu0 0.0
    %1188 = vmatpush1.msra.mxu0 0.0
    %1189 = vmatprep.subr.mxu0 0.0
    %1190 = vmatpush1.msra.mxu0 0.0
    %1191 = vmatprep.subr.mxu0 0.0
    %1192 = vmatpush1.msra.mxu0 0.0
    %1193 = vmatprep.subr.mxu0 0.0
    %1194 = vmatpush1.msra.mxu0 0.0
    %1195 = vmatprep.subr.mxu0 0.0
    %1196 = vmatpush1.msra.mxu0 0.0
    %1197 = vmatprep.subr.mxu0 0.0
    %1198 = vmatpush1.msra.mxu0 0.0
    %1199 = vmatprep.subr.mxu0 0.0
    %1200 = vmatpush1.msra.mxu0 0.0
    %1201 = vmatprep.subr.mxu0 0.0
    %1202 = vmatpush1.msra.mxu0 0.0
    %1203 = vmatprep.subr.mxu0 0.0
    %1204 = vmatpush1.msra.mxu0 0.0
    %1205 = vmatprep.subr.mxu0 0.0
    %1206 = vmatpush1.msra.mxu0 0.0
    %1207 = vmatprep.subr.mxu0 0.0
    %1208 = vmatpush1.msra.mxu0 0.0
    %1209 = vmatprep.subr.mxu0 0.0
    %1210 = vmatpush1.msra.mxu0 0.0
    %1211 = vmatprep.subr.mxu0 0.0
    %1212 = vmatpush1.msra.mxu0 0.0
    %1213 = vmatprep.subr.mxu0 0.0
    %1214 = vmatpush1.msra.mxu0 0.0
    %1215 = vmatprep.subr.mxu0 0.0
    %1216 = vmatpush1.msra.mxu0 0.0
    %1217 = vmatprep.subr.mxu0 0.0
    %1218 = vmatpush1.msra.mxu0 0.0
    %1219 = vmatprep.subr.mxu0 0.0
    %1220 = vmatpush1.msra.mxu0 0.0
    %1221 = vmatprep.subr.mxu0 0.0
    %1222 = vmatpush1.msra.mxu0 0.0
    %1223 = vmatprep.subr.mxu0 0.0
    %1224 = vmatpush1.msra.mxu0 0.0
    %1225 = vmatprep.subr.mxu0 0.0
    %1226 = vmatpush1.msra.mxu0 0.0
    %1227 = vmatprep.subr.mxu0 0.0
    %1228 = vmatpush1.msra.mxu0 0.0
    %1229 = vmatprep.subr.mxu0 0.0
    %1230 = vmatpush1.msra.mxu0 0.0
    %1231 = vmatprep.subr.mxu0 0.0
    %1232 = vmatpush1.msra.mxu0 0.0
    %1233 = vmatprep.subr.mxu0 0.0
    %1234 = vmatpush1.msra.mxu0 0.0
    %1235 = vmatprep.subr.mxu0 0.0
    %1236 = vmatpush1.msra.mxu0 0.0
    %1237 = vmatprep.subr.mxu0 0.0
    %1238 = vmatpush1.msra.mxu0 0.0
    %1239 = vmatprep.subr.mxu0 0.0
    %1240 = vmatpush1.msra.mxu0 0.0
    %1241 = vmatprep.subr.mxu0 0.0
    %1242 = vmatpush1.msra.mxu0 0.0
    %1243 = vmatprep.mubr.f32.mxu0 0.0
    %1244 = vmatmul.mubr.f32.gmra.mrb[0].mxu0 %v1177
    %v1245 = vpop.f32.mrb[0].mxu0
    %v1246 = vadd.f32 0.0, %v1245
    %v1247 = vpop.f32.mrb[0].mxu0
    %1248 = vdwg.mxu0
    %v1250 = vrot.slane %v1246, 6
    %v1252 = vadd.f32 %v1099, %v1250
    %v1253 = vtanh.pop %v1252
    %v1255 = vrot.slane %v1253, 2
    %v1256 = vsel %vm138, %v1255, 0
    %1258 = vmatprep.subr.mxu0 0.0
    %1259 = vmatpush1.msra.mxu0 %v27
    %1260 = vmatprep.subr.mxu0 0.0
    %1261 = vmatpush1.msra.mxu0 %v28
    %1262 = vmatprep.subr.mxu0 0.0
    %1263 = vmatpush1.msra.mxu0 %v29
    %1264 = vmatprep.subr.mxu0 0.0
    %1265 = vmatpush1.msra.mxu0 %v30
    %1266 = vmatprep.subr.mxu0 0.0
    %1267 = vmatpush1.msra.mxu0 0.0
    %1268 = vmatprep.subr.mxu0 0.0
    %1269 = vmatpush1.msra.mxu0 0.0
    %1270 = vmatprep.subr.mxu0 0.0
    %1271 = vmatpush1.msra.mxu0 0.0
    %1272 = vmatprep.subr.mxu0 0.0
    %1273 = vmatpush1.msra.mxu0 0.0
    %1274 = vmatprep.subr.mxu0 0.0
    %1275 = vmatpush1.msra.mxu0 0.0
    %1276 = vmatprep.subr.mxu0 0.0
    %1277 = vmatpush1.msra.mxu0 0.0
    %1278 = vmatprep.subr.mxu0 0.0
    %1279 = vmatpush1.msra.mxu0 0.0
    %1280 = vmatprep.subr.mxu0 0.0
    %1281 = vmatpush1.msra.mxu0 0.0
    %1282 = vmatprep.subr.mxu0 0.0
    %1283 = vmatpush1.msra.mxu0 0.0
    %1284 = vmatprep.subr.mxu0 0.0
    %1285 = vmatpush1.msra.mxu0 0.0
    %1286 = vmatprep.subr.mxu0 0.0
    %1287 = vmatpush1.msra.mxu0 0.0
    %1288 = vmatprep.subr.mxu0 0.0
    %1289 = vmatpush1.msra.mxu0 0.0
    %1290 = vmatprep.subr.mxu0 0.0
    %1291 = vmatpush1.msra.mxu0 0.0
    %1292 = vmatprep.subr.mxu0 0.0
    %1293 = vmatpush1.msra.mxu0 0.0
    %1294 = vmatprep.subr.mxu0 0.0
    %1295 = vmatpush1.msra.mxu0 0.0
    %1296 = vmatprep.subr.mxu0 0.0
    %1297 = vmatpush1.msra.mxu0 0.0
    %1298 = vmatprep.subr.mxu0 0.0
    %1299 = vmatpush1.msra.mxu0 0.0
    %1300 = vmatprep.subr.mxu0 0.0
    %1301 = vmatpush1.msra.mxu0 0.0
    %1302 = vmatprep.subr.mxu0 0.0
    %1303 = vmatpush1.msra.mxu0 0.0
    %1304 = vmatprep.subr.mxu0 0.0
    %1305 = vmatpush1.msra.mxu0 0.0
    %1306 = vmatprep.subr.mxu0 0.0
    %1307 = vmatpush1.msra.mxu0 0.0
    %1308 = vmatprep.subr.mxu0 0.0
    %1309 = vmatpush1.msra.mxu0 0.0
    %1310 = vmatprep.subr.mxu0 0.0
    %1311 = vmatpush1.msra.mxu0 0.0
    %1312 = vmatprep.subr.mxu0 0.0
    %1313 = vmatpush1.msra.mxu0 0.0
    %1314 = vmatprep.subr.mxu0 0.0
    %1315 = vmatpush1.msra.mxu0 0.0
    %1316 = vmatprep.subr.mxu0 0.0
    %1317 = vmatpush1.msra.mxu0 0.0
    %1318 = vmatprep.subr.mxu0 0.0
    %1319 = vmatpush1.msra.mxu0 0.0
    %1320 = vmatprep.subr.mxu0 0.0
    %1321 = vmatpush1.msra.mxu0 0.0
    %1322 = vmatprep.mubr.f32.mxu0 0.0
    %1323 = vmatmul.mubr.f32.gmra.mrb[0].mxu0 %v1256
    %v1324 = vpop.f32.mrb[0].mxu0
    %v1325 = vadd.f32 0.0, %v1324
    %v1326 = vpop.f32.mrb[0].mxu0
    %1327 = vdwg.mxu0
    %v1329 = vrot.slane %v1325, 4
    %v1331 = vadd.f32 %v1099, %v1329
    %v1332 = vtanh.pop %v1331
    %v1334 = vrot.slane %v1332, 4
    %v1335 = vsel %vm138, %v1334, 0
    %1337 = vmatprep.subr.mxu0 0.0
    %1338 = vmatpush1.msra.mxu0 %v27
    %1339 = vmatprep.subr.mxu0 0.0
    %1340 = vmatpush1.msra.mxu0 %v28
    %1341 = vmatprep.subr.mxu0 0.0
    %1342 = vmatpush1.msra.mxu0 %v29
    %1343 = vmatprep.subr.mxu0 0.0
    %1344 = vmatpush1.msra.mxu0 %v30
    %1345 = vmatprep.subr.mxu0 0.0
    %1346 = vmatpush1.msra.mxu0 0.0
    %1347 = vmatprep.subr.mxu0 0.0
    %1348 = vmatpush1.msra.mxu0 0.0
    %1349 = vmatprep.subr.mxu0 0.0
    %1350 = vmatpush1.msra.mxu0 0.0
    %1351 = vmatprep.subr.mxu0 0.0
    %1352 = vmatpush1.msra.mxu0 0.0
    %1353 = vmatprep.subr.mxu0 0.0
    %1354 = vmatpush1.msra.mxu0 0.0
    %1355 = vmatprep.subr.mxu0 0.0
    %1356 = vmatpush1.msra.mxu0 0.0
    %1357 = vmatprep.subr.mxu0 0.0
    %1358 = vmatpush1.msra.mxu0 0.0
    %1359 = vmatprep.subr.mxu0 0.0
    %1360 = vmatpush1.msra.mxu0 0.0
    %1361 = vmatprep.subr.mxu0 0.0
    %1362 = vmatpush1.msra.mxu0 0.0
    %1363 = vmatprep.subr.mxu0 0.0
    %1364 = vmatpush1.msra.mxu0 0.0
    %1365 = vmatprep.subr.mxu0 0.0
    %1366 = vmatpush1.msra.mxu0 0.0
    %1367 = vmatprep.subr.mxu0 0.0
    %1368 = vmatpush1.msra.mxu0 0.0
    %1369 = vmatprep.subr.mxu0 0.0
    %1370 = vmatpush1.msra.mxu0 0.0
    %1371 = vmatprep.subr.mxu0 0.0
    %1372 = vmatpush1.msra.mxu0 0.0
    %1373 = vmatprep.subr.mxu0 0.0
    %1374 = vmatpush1.msra.mxu0 0.0
    %1375 = vmatprep.subr.mxu0 0.0
    %1376 = vmatpush1.msra.mxu0 0.0
    %1377 = vmatprep.subr.mxu0 0.0
    %1378 = vmatpush1.msra.mxu0 0.0
    %1379 = vmatprep.subr.mxu0 0.0
    %1380 = vmatpush1.msra.mxu0 0.0
    %1381 = vmatprep.subr.mxu0 0.0
    %1382 = vmatpush1.msra.mxu0 0.0
    %1383 = vmatprep.subr.mxu0 0.0
    %1384 = vmatpush1.msra.mxu0 0.0
    %1385 = vmatprep.subr.mxu0 0.0
    %1386 = vmatpush1.msra.mxu0 0.0
    %1387 = vmatprep.subr.mxu0 0.0
    %1388 = vmatpush1.msra.mxu0 0.0
    %1389 = vmatprep.subr.mxu0 0.0
    %1390 = vmatpush1.msra.mxu0 0.0
    %1391 = vmatprep.subr.mxu0 0.0
    %1392 = vmatpush1.msra.mxu0 0.0
    %1393 = vmatprep.subr.mxu0 0.0
    %1394 = vmatpush1.msra.mxu0 0.0
    %1395 = vmatprep.subr.mxu0 0.0
    %1396 = vmatpush1.msra.mxu0 0.0
    %1397 = vmatprep.subr.mxu0 0.0
    %1398 = vmatpush1.msra.mxu0 0.0
    %1399 = vmatprep.subr.mxu0 0.0
    %1400 = vmatpush1.msra.mxu0 0.0
    %1401 = vmatprep.mubr.f32.mxu0 0.0
    %1402 = vmatmul.mubr.f32.gmra.mrb[0].mxu0 %v1335
    %v1403 = vpop.f32.mrb[0].mxu0
    %v1404 = vadd.f32 0.0, %v1403
    %v1405 = vpop.f32.mrb[0].mxu0
    %1406 = vdwg.mxu0
    %v1408 = vrot.slane %v1404, 2
    %v1410 = vadd.f32 %v1099, %v1408
    %v1411 = vtanh.pop %v1410
    %v1412 = vsel %vm455, %v1175, %v1253
    %v1413 = vsel %vm457, %v1412, %v1332
    %v1414 = vsel %vm459, %v1413, %v1411
    %1415 = vst.msk [vmem:[%s1098] sm:$0xff] %vm138, %v1414
    %v1416 = vld [vmem:[%s3] sm:$0xff]
    %v1417 = vld [vmem:[%s3 + $0x8] sm:$0xff]
    %v1418 = vld [vmem:[%s3 + $0x10] sm:$0xff]
    %v1419 = vld [vmem:[%s3 + $0x18] sm:$0xff]
    %v1420 = vld [vmem:[%s4] sm:$0x1]
    %v1421 = vld [vmem:[%s4 + $0x1] sm:$0x1]
    %v1422 = vld [vmem:[%s4 + $0x2] sm:$0x1]
    %v1423 = vld [vmem:[#allocation2] sm:$0xff]
    %v1424 = vlaneseq
    %v1425 = vshrl.u32 %v1424, 7
    %v1426 = vsub.s32 0, %v1425
    %v1427 = vrot.slane %v1420, %v1426
    %v1429 = vsel %vm138, %v1423, 0
    %1431 = vmatprep.subr.mxu0 0.0
    %1432 = vmatpush1.msra.mxu0 %v1416
    %1433 = vmatprep.subr.mxu0 0.0
    %1434 = vmatpush1.msra.mxu0 %v1417
    %1435 = vmatprep.subr.mxu0 0.0
    %1436 = vmatpush1.msra.mxu0 %v1418
    %1437 = vmatprep.subr.mxu0 0.0
    %1438 = vmatpush1.msra.mxu0 %v1419
    %1439 = vmatprep.subr.mxu0 0.0
    %1440 = vmatpush1.msra.mxu0 0.0
    %1441 = vmatprep.subr.mxu0 0.0
    %1442 = vmatpush1.msra.mxu0 0.0
    %1443 = vmatprep.subr.mxu0 0.0
    %1444 = vmatpush1.msra.mxu0 0.0
    %1445 = vmatprep.subr.mxu0 0.0
    %1446 = vmatpush1.msra.mxu0 0.0
    %1447 = vmatprep.subr.mxu0 0.0
    %1448 = vmatpush1.msra.mxu0 0.0
    %1449 = vmatprep.subr.mxu0 0.0
    %1450 = vmatpush1.msra.mxu0 0.0
    %1451 = vmatprep.subr.mxu0 0.0
    %1452 = vmatpush1.msra.mxu0 0.0
    %1453 = vmatprep.subr.mxu0 0.0
    %1454 = vmatpush1.msra.mxu0 0.0
    %1455 = vmatprep.subr.mxu0 0.0
    %1456 = vmatpush1.msra.mxu0 0.0
    %1457 = vmatprep.subr.mxu0 0.0
    %1458 = vmatpush1.msra.mxu0 0.0
    %1459 = vmatprep.subr.mxu0 0.0
    %1460 = vmatpush1.msra.mxu0 0.0
    %1461 = vmatprep.subr.mxu0 0.0
    %1462 = vmatpush1.msra.mxu0 0.0
    %1463 = vmatprep.subr.mxu0 0.0
    %1464 = vmatpush1.msra.mxu0 0.0
    %1465 = vmatprep.subr.mxu0 0.0
    %1466 = vmatpush1.msra.mxu0 0.0
    %1467 = vmatprep.subr.mxu0 0.0
    %1468 = vmatpush1.msra.mxu0 0.0
    %1469 = vmatprep.subr.mxu0 0.0
    %1470 = vmatpush1.msra.mxu0 0.0
    %1471 = vmatprep.subr.mxu0 0.0
    %1472 = vmatpush1.msra.mxu0 0.0
    %1473 = vmatprep.subr.mxu0 0.0
    %1474 = vmatpush1.msra.mxu0 0.0
    %1475 = vmatprep.subr.mxu0 0.0
    %1476 = vmatpush1.msra.mxu0 0.0
    %1477 = vmatprep.subr.mxu0 0.0
    %1478 = vmatpush1.msra.mxu0 0.0
    %1479 = vmatprep.subr.mxu0 0.0
    %1480 = vmatpush1.msra.mxu0 0.0
    %1481 = vmatprep.subr.mxu0 0.0
    %1482 = vmatpush1.msra.mxu0 0.0
    %1483 = vmatprep.subr.mxu0 0.0
    %1484 = vmatpush1.msra.mxu0 0.0
    %1485 = vmatprep.subr.mxu0 0.0
    %1486 = vmatpush1.msra.mxu0 0.0
    %1487 = vmatprep.subr.mxu0 0.0
    %1488 = vmatpush1.msra.mxu0 0.0
    %1489 = vmatprep.subr.mxu0 0.0
    %1490 = vmatpush1.msra.mxu0 0.0
    %1491 = vmatprep.subr.mxu0 0.0
    %1492 = vmatpush1.msra.mxu0 0.0
    %1493 = vmatprep.subr.mxu0 0.0
    %1494 = vmatpush1.msra.mxu0 0.0
    %1495 = vmatprep.mubr.f32.mxu0 0.0
    %1496 = vmatmul.mubr.f32.gmra.mrb[0].mxu0 %v1429
    %v1497 = vpop.f32.mrb[0].mxu0
    %v1498 = vadd.f32 %v1427, %v1497
    %v1499 = vpop.f32.mrb[0].mxu0
    %1500 = vdwg.mxu0
    %vm1501 = vcmp.gt.f32.partialorder %v1498, 0.0
    %v1502 = vmin.f32 %v1498, 0.0
    %v1503 = vmul.f32 %v1502, 1.442695
    %v1504 = vpow.pop %v1503
    %v1505 = vsub.f32 %v1504, 1.0
    %v1506 = vsel %vm1501, %v1498, %v1505
    %v1507 = vlaneseq
    %v1508 = vshrl.u32 %v1507, 7
    %v1509 = vsub.s32 0, %v1508
    %v1510 = vrot.slane %v1421, %v1509
    %v1511 = vmul.f32 %v1506, %v1510
    %v1512 = vlaneseq
    %v1513 = vshrl.u32 %v1512, 7
    %v1514 = vsub.s32 0, %v1513
    %v1515 = vrot.slane %v1422, %v1514
    %v1516 = vadd.f32 %v1511, %v1515
    %v1517 = vld [vmem:[%s5] sm:$0xff]
    %v1518 = vld [vmem:[%s462] sm:$0xff]
    %v1520 = vsel %vm138, %v1518, 0
    %1522 = vmatprep.subr.mxu0 0.0
    %1523 = vmatpush1.msra.mxu0 %v1416
    %1524 = vmatprep.subr.mxu0 0.0
    %1525 = vmatpush1.msra.mxu0 %v1417
    %1526 = vmatprep.subr.mxu0 0.0
    %1527 = vmatpush1.msra.mxu0 %v1418
    %1528 = vmatprep.subr.mxu0 0.0
    %1529 = vmatpush1.msra.mxu0 %v1419
    %1530 = vmatprep.subr.mxu0 0.0
    %1531 = vmatpush1.msra.mxu0 0.0
    %1532 = vmatprep.subr.mxu0 0.0
    %1533 = vmatpush1.msra.mxu0 0.0
    %1534 = vmatprep.subr.mxu0 0.0
    %1535 = vmatpush1.msra.mxu0 0.0
    %1536 = vmatprep.subr.mxu0 0.0
    %1537 = vmatpush1.msra.mxu0 0.0
    %1538 = vmatprep.subr.mxu0 0.0
    %1539 = vmatpush1.msra.mxu0 0.0
    %1540 = vmatprep.subr.mxu0 0.0
    %1541 = vmatpush1.msra.mxu0 0.0
    %1542 = vmatprep.subr.mxu0 0.0
    %1543 = vmatpush1.msra.mxu0 0.0
    %1544 = vmatprep.subr.mxu0 0.0
    %1545 = vmatpush1.msra.mxu0 0.0
    %1546 = vmatprep.subr.mxu0 0.0
    %1547 = vmatpush1.msra.mxu0 0.0
    %1548 = vmatprep.subr.mxu0 0.0
    %1549 = vmatpush1.msra.mxu0 0.0
    %1550 = vmatprep.subr.mxu0 0.0
    %1551 = vmatpush1.msra.mxu0 0.0
    %1552 = vmatprep.subr.mxu0 0.0
    %1553 = vmatpush1.msra.mxu0 0.0
    %1554 = vmatprep.subr.mxu0 0.0
    %1555 = vmatpush1.msra.mxu0 0.0
    %1556 = vmatprep.subr.mxu0 0.0
    %1557 = vmatpush1.msra.mxu0 0.0
    %1558 = vmatprep.subr.mxu0 0.0
    %1559 = vmatpush1.msra.mxu0 0.0
    %1560 = vmatprep.subr.mxu0 0.0
    %1561 = vmatpush1.msra.mxu0 0.0
    %1562 = vmatprep.subr.mxu0 0.0
    %1563 = vmatpush1.msra.mxu0 0.0
    %1564 = vmatprep.subr.mxu0 0.0
    %1565 = vmatpush1.msra.mxu0 0.0
    %1566 = vmatprep.subr.mxu0 0.0
    %1567 = vmatpush1.msra.mxu0 0.0
    %1568 = vmatprep.subr.mxu0 0.0
    %1569 = vmatpush1.msra.mxu0 0.0
    %1570 = vmatprep.subr.mxu0 0.0
    %1571 = vmatpush1.msra.mxu0 0.0
    %1572 = vmatprep.subr.mxu0 0.0
    %1573 = vmatpush1.msra.mxu0 0.0
    %1574 = vmatprep.subr.mxu0 0.0
    %1575 = vmatpush1.msra.mxu0 0.0
    %1576 = vmatprep.subr.mxu0 0.0
    %1577 = vmatpush1.msra.mxu0 0.0
    %1578 = vmatprep.subr.mxu0 0.0
    %1579 = vmatpush1.msra.mxu0 0.0
    %1580 = vmatprep.subr.mxu0 0.0
    %1581 = vmatpush1.msra.mxu0 0.0
    %1582 = vmatprep.subr.mxu0 0.0
    %1583 = vmatpush1.msra.mxu0 0.0
    %1584 = vmatprep.subr.mxu0 0.0
    %1585 = vmatpush1.msra.mxu0 0.0
    %1586 = vmatprep.mubr.f32.mxu0 0.0
    %1587 = vmatmul.mubr.f32.gmra.mrb[0].mxu0 %v1520
    %v1588 = vpop.f32.mrb[0].mxu0
    %v1589 = vadd.f32 %v1427, %v1588
    %v1590 = vpop.f32.mrb[0].mxu0
    %1591 = vdwg.mxu0
    %vm1592 = vcmp.gt.f32.partialorder %v1589, 0.0
    %v1593 = vmin.f32 %v1589, 0.0
    %v1594 = vmul.f32 %v1593, 1.442695
    %v1595 = vpow.pop %v1594
    %v1596 = vsub.f32 %v1595, 1.0
    %v1597 = vsel %vm1592, %v1589, %v1596
    %v1598 = vmul.f32 %v1597, %v1510
    %v1599 = vadd.f32 %v1598, %v1515
    %s1600 = scalar_lea.vmem %s5, 8
    %v1601 = vld [vmem:[%s1600] sm:$0xff]
    %vm1602 = vcmask 64512
    %v1604 = vsel %vm1602, %v1599, 0
    %1606 = vmatprep.subr.mxu0 0.0
    %1607 = vmatpush1.msra.mxu0 %v1601
    %1608 = vmatprep.subr.mxu0 0.0
    %1609 = vmatpush1.msra.mxu0 0.0
    %1610 = vmatprep.subr.mxu0 0.0
    %1611 = vmatpush1.msra.mxu0 0.0
    %1612 = vmatprep.subr.mxu0 0.0
    %1613 = vmatpush1.msra.mxu0 0.0
    %1614 = vmatprep.subr.mxu0 0.0
    %1615 = vmatpush1.msra.mxu0 0.0
    %1616 = vmatprep.subr.mxu0 0.0
    %1617 = vmatpush1.msra.mxu0 0.0
    %1618 = vmatprep.subr.mxu0 0.0
    %1619 = vmatpush1.msra.mxu0 0.0
    %1620 = vmatprep.subr.mxu0 0.0
    %1621 = vmatpush1.msra.mxu0 0.0
    %1622 = vmatprep.subr.mxu0 0.0
    %1623 = vmatpush1.msra.mxu0 0.0
    %1624 = vmatprep.subr.mxu0 0.0
    %1625 = vmatpush1.msra.mxu0 0.0
    %1626 = vmatprep.subr.mxu0 0.0
    %1627 = vmatpush1.msra.mxu0 0.0
    %1628 = vmatprep.subr.mxu0 0.0
    %1629 = vmatpush1.msra.mxu0 0.0
    %1630 = vmatprep.subr.mxu0 0.0
    %1631 = vmatpush1.msra.mxu0 0.0
    %1632 = vmatprep.subr.mxu0 0.0
    %1633 = vmatpush1.msra.mxu0 0.0
    %1634 = vmatprep.subr.mxu0 0.0
    %1635 = vmatpush1.msra.mxu0 0.0
    %1636 = vmatprep.subr.mxu0 0.0
    %1637 = vmatpush1.msra.mxu0 0.0
    %1638 = vmatprep.subr.mxu0 0.0
    %1639 = vmatpush1.msra.mxu0 0.0
    %1640 = vmatprep.subr.mxu0 0.0
    %1641 = vmatpush1.msra.mxu0 0.0
    %1642 = vmatprep.subr.mxu0 0.0
    %1643 = vmatpush1.msra.mxu0 0.0
    %1644 = vmatprep.subr.mxu0 0.0
    %1645 = vmatpush1.msra.mxu0 0.0
    %1646 = vmatprep.subr.mxu0 0.0
    %1647 = vmatpush1.msra.mxu0 0.0
    %1648 = vmatprep.subr.mxu0 0.0
    %1649 = vmatpush1.msra.mxu0 0.0
    %1650 = vmatprep.subr.mxu0 0.0
    %1651 = vmatpush1.msra.mxu0 0.0
    %1652 = vmatprep.subr.mxu0 0.0
    %1653 = vmatpush1.msra.mxu0 0.0
    %1654 = vmatprep.subr.mxu0 0.0
    %1655 = vmatpush1.msra.mxu0 0.0
    %1656 = vmatprep.subr.mxu0 0.0
    %1657 = vmatpush1.msra.mxu0 0.0
    %1658 = vmatprep.subr.mxu0 0.0
    %1659 = vmatpush1.msra.mxu0 0.0
    %1660 = vmatprep.subr.mxu0 0.0
    %1661 = vmatpush1.msra.mxu0 0.0
    %1662 = vmatprep.subr.mxu0 0.0
    %1663 = vmatpush1.msra.mxu0 0.0
    %1664 = vmatprep.subr.mxu0 0.0
    %1665 = vmatpush1.msra.mxu0 0.0
    %1666 = vmatprep.subr.mxu0 0.0
    %1667 = vmatpush1.msra.mxu0 0.0
    %1668 = vmatprep.subr.mxu0 0.0
    %1669 = vmatpush1.msra.mxu0 0.0
    %1670 = vmatprep.mubr.f32.mxu0 0.0
    %1671 = vmatmul.mubr.f32.gmra.mrb[0].mxu0 %v1604
    %v1672 = vpop.f32.mrb[0].mxu0
    %v1673 = vadd.f32 0.0, %v1672
    %v1674 = vpop.f32.mrb[0].mxu0
    %1675 = vdwg.mxu0
    %v1677 = vsel %vm1602, %v1516, 0
    %1679 = vmatprep.subr.mxu0 0.0
    %1680 = vmatpush1.msra.mxu0 %v1517
    %1681 = vmatprep.subr.mxu0 0.0
    %1682 = vmatpush1.msra.mxu0 0.0
    %1683 = vmatprep.subr.mxu0 0.0
    %1684 = vmatpush1.msra.mxu0 0.0
    %1685 = vmatprep.subr.mxu0 0.0
    %1686 = vmatpush1.msra.mxu0 0.0
    %1687 = vmatprep.subr.mxu0 0.0
    %1688 = vmatpush1.msra.mxu0 0.0
    %1689 = vmatprep.subr.mxu0 0.0
    %1690 = vmatpush1.msra.mxu0 0.0
    %1691 = vmatprep.subr.mxu0 0.0
    %1692 = vmatpush1.msra.mxu0 0.0
    %1693 = vmatprep.subr.mxu0 0.0
    %1694 = vmatpush1.msra.mxu0 0.0
    %1695 = vmatprep.subr.mxu0 0.0
    %1696 = vmatpush1.msra.mxu0 0.0
    %1697 = vmatprep.subr.mxu0 0.0
    %1698 = vmatpush1.msra.mxu0 0.0
    %1699 = vmatprep.subr.mxu0 0.0
    %1700 = vmatpush1.msra.mxu0 0.0
    %1701 = vmatprep.subr.mxu0 0.0
    %1702 = vmatpush1.msra.mxu0 0.0
    %1703 = vmatprep.subr.mxu0 0.0
    %1704 = vmatpush1.msra.mxu0 0.0
    %1705 = vmatprep.subr.mxu0 0.0
    %1706 = vmatpush1.msra.mxu0 0.0
    %1707 = vmatprep.subr.mxu0 0.0
    %1708 = vmatpush1.msra.mxu0 0.0
    %1709 = vmatprep.subr.mxu0 0.0
    %1710 = vmatpush1.msra.mxu0 0.0
    %1711 = vmatprep.subr.mxu0 0.0
    %1712 = vmatpush1.msra.mxu0 0.0
    %1713 = vmatprep.subr.mxu0 0.0
    %1714 = vmatpush1.msra.mxu0 0.0
    %1715 = vmatprep.subr.mxu0 0.0
    %1716 = vmatpush1.msra.mxu0 0.0
    %1717 = vmatprep.subr.mxu0 0.0
    %1718 = vmatpush1.msra.mxu0 0.0
    %1719 = vmatprep.subr.mxu0 0.0
    %1720 = vmatpush1.msra.mxu0 0.0
    %1721 = vmatprep.subr.mxu0 0.0
    %1722 = vmatpush1.msra.mxu0 0.0
    %1723 = vmatprep.subr.mxu0 0.0
    %1724 = vmatpush1.msra.mxu0 0.0
    %1725 = vmatprep.subr.mxu0 0.0
    %1726 = vmatpush1.msra.mxu0 0.0
    %1727 = vmatprep.subr.mxu0 0.0
    %1728 = vmatpush1.msra.mxu0 0.0
    %1729 = vmatprep.subr.mxu0 0.0
    %1730 = vmatpush1.msra.mxu0 0.0
    %1731 = vmatprep.subr.mxu0 0.0
    %1732 = vmatpush1.msra.mxu0 0.0
    %1733 = vmatprep.subr.mxu0 0.0
    %1734 = vmatpush1.msra.mxu0 0.0
    %1735 = vmatprep.subr.mxu0 0.0
    %1736 = vmatpush1.msra.mxu0 0.0
    %1737 = vmatprep.subr.mxu0 0.0
    %1738 = vmatpush1.msra.mxu0 0.0
    %1739 = vmatprep.subr.mxu0 0.0
    %1740 = vmatpush1.msra.mxu0 0.0
    %1741 = vmatprep.subr.mxu0 0.0
    %1742 = vmatpush1.msra.mxu0 0.0
    %1743 = vmatprep.mubr.f32.mxu0 0.0
    %1744 = vmatmul.mubr.f32.gmra.mrb[0].mxu0 %v1677
    %v1745 = vpop.f32.mrb[0].mxu0
    %v1746 = vadd.f32 %v1673, %v1745
    %v1747 = vpop.f32.mrb[0].mxu0
    %1748 = vdwg.mxu0
    %v1749 = vld [vmem:[%s780] sm:$0xff]
    %v1751 = vsel %vm138, %v1749, 0
    %1753 = vmatprep.subr.mxu0 0.0
    %1754 = vmatpush1.msra.mxu0 %v1416
    %1755 = vmatprep.subr.mxu0 0.0
    %1756 = vmatpush1.msra.mxu0 %v1417
    %1757 = vmatprep.subr.mxu0 0.0
    %1758 = vmatpush1.msra.mxu0 %v1418
    %1759 = vmatprep.subr.mxu0 0.0
    %1760 = vmatpush1.msra.mxu0 %v1419
    %1761 = vmatprep.subr.mxu0 0.0
    %1762 = vmatpush1.msra.mxu0 0.0
    %1763 = vmatprep.subr.mxu0 0.0
    %1764 = vmatpush1.msra.mxu0 0.0
    %1765 = vmatprep.subr.mxu0 0.0
    %1766 = vmatpush1.msra.mxu0 0.0
    %1767 = vmatprep.subr.mxu0 0.0
    %1768 = vmatpush1.msra.mxu0 0.0
    %1769 = vmatprep.subr.mxu0 0.0
    %1770 = vmatpush1.msra.mxu0 0.0
    %1771 = vmatprep.subr.mxu0 0.0
    %1772 = vmatpush1.msra.mxu0 0.0
    %1773 = vmatprep.subr.mxu0 0.0
    %1774 = vmatpush1.msra.mxu0 0.0
    %1775 = vmatprep.subr.mxu0 0.0
    %1776 = vmatpush1.msra.mxu0 0.0
    %1777 = vmatprep.subr.mxu0 0.0
    %1778 = vmatpush1.msra.mxu0 0.0
    %1779 = vmatprep.subr.mxu0 0.0
    %1780 = vmatpush1.msra.mxu0 0.0
    %1781 = vmatprep.subr.mxu0 0.0
    %1782 = vmatpush1.msra.mxu0 0.0
    %1783 = vmatprep.subr.mxu0 0.0
    %1784 = vmatpush1.msra.mxu0 0.0
    %1785 = vmatprep.subr.mxu0 0.0
    %1786 = vmatpush1.msra.mxu0 0.0
    %1787 = vmatprep.subr.mxu0 0.0
    %1788 = vmatpush1.msra.mxu0 0.0
    %1789 = vmatprep.subr.mxu0 0.0
    %1790 = vmatpush1.msra.mxu0 0.0
    %1791 = vmatprep.subr.mxu0 0.0
    %1792 = vmatpush1.msra.mxu0 0.0
    %1793 = vmatprep.subr.mxu0 0.0
    %1794 = vmatpush1.msra.mxu0 0.0
    %1795 = vmatprep.subr.mxu0 0.0
    %1796 = vmatpush1.msra.mxu0 0.0
    %1797 = vmatprep.subr.mxu0 0.0
    %1798 = vmatpush1.msra.mxu0 0.0
    %1799 = vmatprep.subr.mxu0 0.0
    %1800 = vmatpush1.msra.mxu0 0.0
    %1801 = vmatprep.subr.mxu0 0.0
    %1802 = vmatpush1.msra.mxu0 0.0
    %1803 = vmatprep.subr.mxu0 0.0
    %1804 = vmatpush1.msra.mxu0 0.0
    %1805 = vmatprep.subr.mxu0 0.0
    %1806 = vmatpush1.msra.mxu0 0.0
    %1807 = vmatprep.subr.mxu0 0.0
    %1808 = vmatpush1.msra.mxu0 0.0
    %1809 = vmatprep.subr.mxu0 0.0
    %1810 = vmatpush1.msra.mxu0 0.0
    %1811 = vmatprep.subr.mxu0 0.0
    %1812 = vmatpush1.msra.mxu0 0.0
    %1813 = vmatprep.subr.mxu0 0.0
    %1814 = vmatpush1.msra.mxu0 0.0
    %1815 = vmatprep.subr.mxu0 0.0
    %1816 = vmatpush1.msra.mxu0 0.0
    %1817 = vmatprep.mubr.f32.mxu0 0.0
    %1818 = vmatmul.mubr.f32.gmra.mrb[0].mxu0 %v1751
    %v1819 = vpop.f32.mrb[0].mxu0
    %v1820 = vadd.f32 %v1427, %v1819
    %v1821 = vpop.f32.mrb[0].mxu0
    %1822 = vdwg.mxu0
    %vm1823 = vcmp.gt.f32.partialorder %v1820, 0.0
    %v1824 = vmin.f32 %v1820, 0.0
    %v1825 = vmul.f32 %v1824, 1.442695
    %v1826 = vpow.pop %v1825
    %v1827 = vsub.f32 %v1826, 1.0
    %v1828 = vsel %vm1823, %v1820, %v1827
    %v1829 = vmul.f32 %v1828, %v1510
    %v1830 = vadd.f32 %v1829, %v1515
    %s1831 = scalar_lea.vmem %s5, 16
    %v1832 = vld [vmem:[%s1831] sm:$0xff]
    %v1834 = vsel %vm1602, %v1830, 0
    %1836 = vmatprep.subr.mxu0 0.0
    %1837 = vmatpush1.msra.mxu0 %v1832
    %1838 = vmatprep.subr.mxu0 0.0
    %1839 = vmatpush1.msra.mxu0 0.0
    %1840 = vmatprep.subr.mxu0 0.0
    %1841 = vmatpush1.msra.mxu0 0.0
    %1842 = vmatprep.subr.mxu0 0.0
    %1843 = vmatpush1.msra.mxu0 0.0
    %1844 = vmatprep.subr.mxu0 0.0
    %1845 = vmatpush1.msra.mxu0 0.0
    %1846 = vmatprep.subr.mxu0 0.0
    %1847 = vmatpush1.msra.mxu0 0.0
    %1848 = vmatprep.subr.mxu0 0.0
    %1849 = vmatpush1.msra.mxu0 0.0
    %1850 = vmatprep.subr.mxu0 0.0
    %1851 = vmatpush1.msra.mxu0 0.0
    %1852 = vmatprep.subr.mxu0 0.0
    %1853 = vmatpush1.msra.mxu0 0.0
    %1854 = vmatprep.subr.mxu0 0.0
    %1855 = vmatpush1.msra.mxu0 0.0
    %1856 = vmatprep.subr.mxu0 0.0
    %1857 = vmatpush1.msra.mxu0 0.0
    %1858 = vmatprep.subr.mxu0 0.0
    %1859 = vmatpush1.msra.mxu0 0.0
    %1860 = vmatprep.subr.mxu0 0.0
    %1861 = vmatpush1.msra.mxu0 0.0
    %1862 = vmatprep.subr.mxu0 0.0
    %1863 = vmatpush1.msra.mxu0 0.0
    %1864 = vmatprep.subr.mxu0 0.0
    %1865 = vmatpush1.msra.mxu0 0.0
    %1866 = vmatprep.subr.mxu0 0.0
    %1867 = vmatpush1.msra.mxu0 0.0
    %1868 = vmatprep.subr.mxu0 0.0
    %1869 = vmatpush1.msra.mxu0 0.0
    %1870 = vmatprep.subr.mxu0 0.0
    %1871 = vmatpush1.msra.mxu0 0.0
    %1872 = vmatprep.subr.mxu0 0.0
    %1873 = vmatpush1.msra.mxu0 0.0
    %1874 = vmatprep.subr.mxu0 0.0
    %1875 = vmatpush1.msra.mxu0 0.0
    %1876 = vmatprep.subr.mxu0 0.0
    %1877 = vmatpush1.msra.mxu0 0.0
    %1878 = vmatprep.subr.mxu0 0.0
    %1879 = vmatpush1.msra.mxu0 0.0
    %1880 = vmatprep.subr.mxu0 0.0
    %1881 = vmatpush1.msra.mxu0 0.0
    %1882 = vmatprep.subr.mxu0 0.0
    %1883 = vmatpush1.msra.mxu0 0.0
    %1884 = vmatprep.subr.mxu0 0.0
    %1885 = vmatpush1.msra.mxu0 0.0
    %1886 = vmatprep.subr.mxu0 0.0
    %1887 = vmatpush1.msra.mxu0 0.0
    %1888 = vmatprep.subr.mxu0 0.0
    %1889 = vmatpush1.msra.mxu0 0.0
    %1890 = vmatprep.subr.mxu0 0.0
    %1891 = vmatpush1.msra.mxu0 0.0
    %1892 = vmatprep.subr.mxu0 0.0
    %1893 = vmatpush1.msra.mxu0 0.0
    %1894 = vmatprep.subr.mxu0 0.0
    %1895 = vmatpush1.msra.mxu0 0.0
    %1896 = vmatprep.subr.mxu0 0.0
    %1897 = vmatpush1.msra.mxu0 0.0
    %1898 = vmatprep.subr.mxu0 0.0
    %1899 = vmatpush1.msra.mxu0 0.0
    %1900 = vmatprep.mubr.f32.mxu0 0.0
    %1901 = vmatmul.mubr.f32.gmra.mrb[0].mxu0 %v1834
    %v1902 = vpop.f32.mrb[0].mxu0
    %v1903 = vadd.f32 0.0, %v1902
    %v1904 = vpop.f32.mrb[0].mxu0
    %1905 = vdwg.mxu0
    %v1906 = vadd.f32 %v1746, %v1903
    %v1907 = vld [vmem:[%s1098] sm:$0xff]
    %v1909 = vsel %vm138, %v1907, 0
    %1911 = vmatprep.subr.mxu0 0.0
    %1912 = vmatpush1.msra.mxu0 %v1416
    %1913 = vmatprep.subr.mxu0 0.0
    %1914 = vmatpush1.msra.mxu0 %v1417
    %1915 = vmatprep.subr.mxu0 0.0
    %1916 = vmatpush1.msra.mxu0 %v1418
    %1917 = vmatprep.subr.mxu0 0.0
    %1918 = vmatpush1.msra.mxu0 %v1419
    %1919 = vmatprep.subr.mxu0 0.0
    %1920 = vmatpush1.msra.mxu0 0.0
    %1921 = vmatprep.subr.mxu0 0.0
    %1922 = vmatpush1.msra.mxu0 0.0
    %1923 = vmatprep.subr.mxu0 0.0
    %1924 = vmatpush1.msra.mxu0 0.0
    %1925 = vmatprep.subr.mxu0 0.0
    %1926 = vmatpush1.msra.mxu0 0.0
    %1927 = vmatprep.subr.mxu0 0.0
    %1928 = vmatpush1.msra.mxu0 0.0
    %1929 = vmatprep.subr.mxu0 0.0
    %1930 = vmatpush1.msra.mxu0 0.0
    %1931 = vmatprep.subr.mxu0 0.0
    %1932 = vmatpush1.msra.mxu0 0.0
    %1933 = vmatprep.subr.mxu0 0.0
    %1934 = vmatpush1.msra.mxu0 0.0
    %1935 = vmatprep.subr.mxu0 0.0
    %1936 = vmatpush1.msra.mxu0 0.0
    %1937 = vmatprep.subr.mxu0 0.0
    %1938 = vmatpush1.msra.mxu0 0.0
    %1939 = vmatprep.subr.mxu0 0.0
    %1940 = vmatpush1.msra.mxu0 0.0
    %1941 = vmatprep.subr.mxu0 0.0
    %1942 = vmatpush1.msra.mxu0 0.0
    %1943 = vmatprep.subr.mxu0 0.0
    %1944 = vmatpush1.msra.mxu0 0.0
    %1945 = vmatprep.subr.mxu0 0.0
    %1946 = vmatpush1.msra.mxu0 0.0
    %1947 = vmatprep.subr.mxu0 0.0
    %1948 = vmatpush1.msra.mxu0 0.0
    %1949 = vmatprep.subr.mxu0 0.0
    %1950 = vmatpush1.msra.mxu0 0.0
    %1951 = vmatprep.subr.mxu0 0.0
    %1952 = vmatpush1.msra.mxu0 0.0
    %1953 = vmatprep.subr.mxu0 0.0
    %1954 = vmatpush1.msra.mxu0 0.0
    %1955 = vmatprep.subr.mxu0 0.0
    %1956 = vmatpush1.msra.mxu0 0.0
    %1957 = vmatprep.subr.mxu0 0.0
    %1958 = vmatpush1.msra.mxu0 0.0
    %1959 = vmatprep.subr.mxu0 0.0
    %1960 = vmatpush1.msra.mxu0 0.0
    %1961 = vmatprep.subr.mxu0 0.0
    %1962 = vmatpush1.msra.mxu0 0.0
    %1963 = vmatprep.subr.mxu0 0.0
    %1964 = vmatpush1.msra.mxu0 0.0
    %1965 = vmatprep.subr.mxu0 0.0
    %1966 = vmatpush1.msra.mxu0 0.0
    %1967 = vmatprep.subr.mxu0 0.0
    %1968 = vmatpush1.msra.mxu0 0.0
    %1969 = vmatprep.subr.mxu0 0.0
    %1970 = vmatpush1.msra.mxu0 0.0
    %1971 = vmatprep.subr.mxu0 0.0
    %1972 = vmatpush1.msra.mxu0 0.0
    %1973 = vmatprep.subr.mxu0 0.0
    %1974 = vmatpush1.msra.mxu0 0.0
    %1975 = vmatprep.mubr.f32.mxu0 0.0
    %1976 = vmatmul.mubr.f32.gmra.mrb[0].mxu0 %v1909
    %v1977 = vpop.f32.mrb[0].mxu0
    %v1978 = vadd.f32 %v1427, %v1977
    %v1979 = vpop.f32.mrb[0].mxu0
    %1980 = vdwg.mxu0
    %vm1981 = vcmp.gt.f32.partialorder %v1978, 0.0
    %v1982 = vmin.f32 %v1978, 0.0
    %v1983 = vmul.f32 %v1982, 1.442695
    %v1984 = vpow.pop %v1983
    %v1985 = vsub.f32 %v1984, 1.0
    %v1986 = vsel %vm1981, %v1978, %v1985
    %v1987 = vmul.f32 %v1986, %v1510
    %v1988 = vadd.f32 %v1987, %v1515
    %s1989 = scalar_lea.vmem %s5, 24
    %v1990 = vld [vmem:[%s1989] sm:$0xff]
    %v1992 = vsel %vm1602, %v1988, 0
    %1994 = vmatprep.subr.mxu0 0.0
    %1995 = vmatpush1.msra.mxu0 %v1990
    %1996 = vmatprep.subr.mxu0 0.0
    %1997 = vmatpush1.msra.mxu0 0.0
    %1998 = vmatprep.subr.mxu0 0.0
    %1999 = vmatpush1.msra.mxu0 0.0
    %2000 = vmatprep.subr.mxu0 0.0
    %2001 = vmatpush1.msra.mxu0 0.0
    %2002 = vmatprep.subr.mxu0 0.0
    %2003 = vmatpush1.msra.mxu0 0.0
    %2004 = vmatprep.subr.mxu0 0.0
    %2005 = vmatpush1.msra.mxu0 0.0
    %2006 = vmatprep.subr.mxu0 0.0
    %2007 = vmatpush1.msra.mxu0 0.0
    %2008 = vmatprep.subr.mxu0 0.0
    %2009 = vmatpush1.msra.mxu0 0.0
    %2010 = vmatprep.subr.mxu0 0.0
    %2011 = vmatpush1.msra.mxu0 0.0
    %2012 = vmatprep.subr.mxu0 0.0
    %2013 = vmatpush1.msra.mxu0 0.0
    %2014 = vmatprep.subr.mxu0 0.0
    %2015 = vmatpush1.msra.mxu0 0.0
    %2016 = vmatprep.subr.mxu0 0.0
    %2017 = vmatpush1.msra.mxu0 0.0
    %2018 = vmatprep.subr.mxu0 0.0
    %2019 = vmatpush1.msra.mxu0 0.0
    %2020 = vmatprep.subr.mxu0 0.0
    %2021 = vmatpush1.msra.mxu0 0.0
    %2022 = vmatprep.subr.mxu0 0.0
    %2023 = vmatpush1.msra.mxu0 0.0
    %2024 = vmatprep.subr.mxu0 0.0
    %2025 = vmatpush1.msra.mxu0 0.0
    %2026 = vmatprep.subr.mxu0 0.0
    %2027 = vmatpush1.msra.mxu0 0.0
    %2028 = vmatprep.subr.mxu0 0.0
    %2029 = vmatpush1.msra.mxu0 0.0
    %2030 = vmatprep.subr.mxu0 0.0
    %2031 = vmatpush1.msra.mxu0 0.0
    %2032 = vmatprep.subr.mxu0 0.0
    %2033 = vmatpush1.msra.mxu0 0.0
    %2034 = vmatprep.subr.mxu0 0.0
    %2035 = vmatpush1.msra.mxu0 0.0
    %2036 = vmatprep.subr.mxu0 0.0
    %2037 = vmatpush1.msra.mxu0 0.0
    %2038 = vmatprep.subr.mxu0 0.0
    %2039 = vmatpush1.msra.mxu0 0.0
    %2040 = vmatprep.subr.mxu0 0.0
    %2041 = vmatpush1.msra.mxu0 0.0
    %2042 = vmatprep.subr.mxu0 0.0
    %2043 = vmatpush1.msra.mxu0 0.0
    %2044 = vmatprep.subr.mxu0 0.0
    %2045 = vmatpush1.msra.mxu0 0.0
    %2046 = vmatprep.subr.mxu0 0.0
    %2047 = vmatpush1.msra.mxu0 0.0
    %2048 = vmatprep.subr.mxu0 0.0
    %2049 = vmatpush1.msra.mxu0 0.0
    %2050 = vmatprep.subr.mxu0 0.0
    %2051 = vmatpush1.msra.mxu0 0.0
    %2052 = vmatprep.subr.mxu0 0.0
    %2053 = vmatpush1.msra.mxu0 0.0
    %2054 = vmatprep.subr.mxu0 0.0
    %2055 = vmatpush1.msra.mxu0 0.0
    %2056 = vmatprep.subr.mxu0 0.0
    %2057 = vmatpush1.msra.mxu0 0.0
    %2058 = vmatprep.mubr.f32.mxu0 0.0
    %2059 = vmatmul.mubr.f32.gmra.mrb[0].mxu0 %v1992
    %v2060 = vpop.f32.mrb[0].mxu0
    %v2061 = vadd.f32 0.0, %v2060
    %v2062 = vpop.f32.mrb[0].mxu0
    %2063 = vdwg.mxu0
    %v2064 = vadd.f32 %v1906, %v2061
    %v2065 = vlaneseq
    %v2066 = vand.u32 %v2065, 127
    %vm2067 = vcmp.lt.s32.totalorder %v2066, 0
    %v2068 = vsub.s32 0, %v2066
    %v2069 = vsel %vm2067, %v2068, %v2066
    %v2070 = vshrl.u32 %v2069, 1
    %v2071 = vand.u32 %v2069, 1
    %v2072 = vsub.s32 0, %v2071
    %v2073 = vsel %vm2067, %v2072, %v2071
    %vm2074 = vcmp.ne.s32.totalorder %v2073, 0
    %vm2075 = vcmp.lt.s32.totalorder %v2073, 0
    %vm2076 = vmand %vm2075, %vm2074
    %v2077 = vadd.s32 %v2073, 2
    %v2078 = vsel %vm2076, %v2077, %v2073
    %v2079 = vlaneseq
    %v2080 = vshrl.u32 %v2079, 7
    %vm2081 = vcmp.eq.s32.totalorder %v2078, %v2080
    %v2082 = vsel %vm2081, 1, 0
    %v2083 = vcvt.s32.f32 %v2082
    %v2084 = vld [vmem:[%s6] sm:$0x1]
    %v2086 = vlaneseq
    %v2087 = vshrl.u32 %v2086, 7
    %v2088 = vsub.s32 0, %v2087
    %v2089 = vrot.slane %v2084, %v2088
    %v2092 = vsel %vm1602, %v2083, 0
    %2094 = vmatprep.subr.mxu0 0.0
    %2095 = vmatpush1.msra.mxu0 %v2064
    %2096 = vmatprep.subr.mxu0 0.0
    %2097 = vmatpush1.msra.mxu0 0.0
    %2098 = vmatprep.subr.mxu0 0.0
    %2099 = vmatpush1.msra.mxu0 0.0
    %2100 = vmatprep.subr.mxu0 0.0
    %2101 = vmatpush1.msra.mxu0 0.0
    %2102 = vmatprep.subr.mxu0 0.0
    %2103 = vmatpush1.msra.mxu0 0.0
    %2104 = vmatprep.subr.mxu0 0.0
    %2105 = vmatpush1.msra.mxu0 0.0
    %2106 = vmatprep.subr.mxu0 0.0
    %2107 = vmatpush1.msra.mxu0 0.0
    %2108 = vmatprep.subr.mxu0 0.0
    %2109 = vmatpush1.msra.mxu0 0.0
    %2110 = vmatprep.subr.mxu0 0.0
    %2111 = vmatpush1.msra.mxu0 0.0
    %2112 = vmatprep.subr.mxu0 0.0
    %2113 = vmatpush1.msra.mxu0 0.0
    %2114 = vmatprep.subr.mxu0 0.0
    %2115 = vmatpush1.msra.mxu0 0.0
    %2116 = vmatprep.subr.mxu0 0.0
    %2117 = vmatpush1.msra.mxu0 0.0
    %2118 = vmatprep.subr.mxu0 0.0
    %2119 = vmatpush1.msra.mxu0 0.0
    %2120 = vmatprep.subr.mxu0 0.0
    %2121 = vmatpush1.msra.mxu0 0.0
    %2122 = vmatprep.subr.mxu0 0.0
    %2123 = vmatpush1.msra.mxu0 0.0
    %2124 = vmatprep.subr.mxu0 0.0
    %2125 = vmatpush1.msra.mxu0 0.0
    %2126 = vmatprep.subr.mxu0 0.0
    %2127 = vmatpush1.msra.mxu0 0.0
    %2128 = vmatprep.subr.mxu0 0.0
    %2129 = vmatpush1.msra.mxu0 0.0
    %2130 = vmatprep.subr.mxu0 0.0
    %2131 = vmatpush1.msra.mxu0 0.0
    %2132 = vmatprep.subr.mxu0 0.0
    %2133 = vmatpush1.msra.mxu0 0.0
    %2134 = vmatprep.subr.mxu0 0.0
    %2135 = vmatpush1.msra.mxu0 0.0
    %2136 = vmatprep.subr.mxu0 0.0
    %2137 = vmatpush1.msra.mxu0 0.0
    %2138 = vmatprep.subr.mxu0 0.0
    %2139 = vmatpush1.msra.mxu0 0.0
    %2140 = vmatprep.subr.mxu0 0.0
    %2141 = vmatpush1.msra.mxu0 0.0
    %2142 = vmatprep.subr.mxu0 0.0
    %2143 = vmatpush1.msra.mxu0 0.0
    %2144 = vmatprep.subr.mxu0 0.0
    %2145 = vmatpush1.msra.mxu0 0.0
    %2146 = vmatprep.subr.mxu0 0.0
    %2147 = vmatpush1.msra.mxu0 0.0
    %2148 = vmatprep.subr.mxu0 0.0
    %2149 = vmatpush1.msra.mxu0 0.0
    %2150 = vmatprep.subr.mxu0 0.0
    %2151 = vmatpush1.msra.mxu0 0.0
    %2152 = vmatprep.subr.mxu0 0.0
    %2153 = vmatpush1.msra.mxu0 0.0
    %2154 = vmatprep.subr.mxu0 0.0
    %2155 = vmatpush1.msra.mxu0 0.0
    %2156 = vmatprep.subr.mxu0 0.0
    %2157 = vmatpush1.msra.mxu0 0.0
    %2158 = vmatprep.mubr.f32.mxu0 0.0
    %2159 = vmatmul.mubr.f32.gmra.mrb[0].mxu0 %v2092
    %v2160 = vpop.f32.mrb[0].mxu0
    %v2161 = vadd.f32 %v2089, %v2160
    %v2162 = vpop.f32.mrb[0].mxu0
    %2163 = vdwg.mxu0
    %vm2164 = vcmask 17408
    %2165 = vst.msk [vmem:[#allocation3] sm:$0x3] %vm2164, %v2161
    // Predicated region
    $region30: #{tpu_custom_call.1} parent=1 // pred_check
      _
    $region31: #{tpu_custom_call.1} parent=1 // pred_check_branch
      %2167 = sbr.rel (0) target = $region33
    $region32: #{tpu_custom_call.1} parent=1 // pred_region
      %s2169 = ssub.s32 32, 32
      %2170 = vsyncadd [#allocation4], %s2169
      %s2172 = sshll.u32 [#allocation3], 4
      %s2173 = int_to_ptr.vmem [resolvable:$true] %s2172
      %2175 = dma.vmem_to_hbm [thread:$0]  %s2173, 32, %s7, [#allocation4]
    $region33: #{tpu_custom_call.1} parent=1 // pred_fallthru
      _
    // Predicated region
    $region34: #{tpu_custom_call.1} parent=1 // pred_check
      _
    $region35: #{tpu_custom_call.1} parent=1 // pred_check_branch
      %2177 = sbr.rel (0) target = $region37
    $region36: #{tpu_custom_call.1} parent=1 // pred_region
      %2178 = dma.done [#allocation4], 32
    $region37: #{tpu_custom_call.1} parent=1 // pred_fallthru
      _
    %2179 = vsyncpa [#allocation4], 1

</llo_original>
